<compile_context>
chip_gen: v5e
topology: v5e:2x2
jax: 0.10.0
libtpu: 0.0.40
codegen_flags: <defaults>
</compile_context>

<pallas_src>
import functools

import jax
import jax.numpy as jnp
from jax import lax
from jax.experimental import pallas as pl
from jax.experimental.pallas import tpu as pltpu

_BN_EPS = 1e-5
_HIDDEN = 256


def _deep_relation_kernel(
    eh_ref, user_ref,                      # (TB, E) each, f32
    w1a_ref, w1b_ref, b1_ref,              # (E, 256) bf16 x2, (1, 256) f32
    w2a_ref, w2b_ref, b2a_ref, b2b_ref,    # (256, E) bf16 x2, (1, E) f32 x2  (bn1-folded)
    w3a_ref, w3b_ref, b3_ref,              # (E, E) bf16 x2, (1, E) f32       (bn2-folded)
    out_ref,                               # (TB, E) f32
    *, compute_dtype,
):
    eh = eh_ref[...]
    user = user_ref[...]
    eh_c = eh.astype(compute_dtype)
    user_c = user.astype(compute_dtype)

    # fc1 + relu.  The concat([eh, user]) is expressed as a split of w1's rows,
    # so the (TB, 2E) feature tensor is never materialized.
    h = (jnp.dot(eh_c, w1a_ref[...], preferred_element_type=jnp.float32)
         + jnp.dot(user_c, w1b_ref[...], preferred_element_type=jnp.float32)
         + b1_ref[...])
    h = jnp.maximum(h, 0.0)
    h_c = h.astype(compute_dtype)

    # fc2 (bn1 folded into w2/b2) + residual add of the feature halves + relu.
    ya = jnp.dot(h_c, w2a_ref[...], preferred_element_type=jnp.float32) + b2a_ref[...] + eh
    yb = jnp.dot(h_c, w2b_ref[...], preferred_element_type=jnp.float32) + b2b_ref[...] + user
    ya = jnp.maximum(ya, 0.0)
    yb = jnp.maximum(yb, 0.0)

    # fc3 (bn2 folded into w3/b3).
    out_ref[...] = (
        jnp.dot(ya.astype(compute_dtype), w3a_ref[...], preferred_element_type=jnp.float32)
        + jnp.dot(yb.astype(compute_dtype), w3b_ref[...], preferred_element_type=jnp.float32)
        + b3_ref[...]
    )


def fold_and_split_params(params, compute_dtype=jnp.bfloat16):
    """Fold eval-mode BNs into the following linears and split along the 2E axis.

    Exact in eval mode (frozen running stats); must be recomputed if BN
    statistics / gamma / beta change.
    """
    (w1, b1, g1, be1, m1, v1,
     w2, b2, g2, be2, m2, v2,
     w3, b3) = params
    in_size = w1.shape[0]
    E = in_size // 2

    # bn1 -> fc2:  fc2(bn1(x)) = x @ (scale1[:,None]*w2) + (shift1 @ w2 + b2)
    scale1 = g1 * lax.rsqrt(v1 + _BN_EPS)            # (1, 256)
    shift1 = be1 - m1 * scale1                       # (1, 256)
    w2f = scale1.reshape(-1, 1) * w2                 # (256, 2E)
    b2f = shift1 @ w2 + b2                           # (1, 2E)

    # bn2 -> fc3
    scale2 = g2 * lax.rsqrt(v2 + _BN_EPS)            # (1, 2E)
    shift2 = be2 - m2 * scale2                       # (1, 2E)
    w3f = scale2.reshape(-1, 1) * w3                 # (2E, E)
    b3f = shift2 @ w3 + b3                           # (1, E)

    cd = compute_dtype
    return (w1[:E].astype(cd), w1[E:].astype(cd), b1,
            w2f[:, :E].astype(cd), w2f[:, E:].astype(cd), b2f[:, :E], b2f[:, E:],
            w3f[:E].astype(cd), w3f[E:].astype(cd), b3f)


def deep_relation_forward(eh_vec, user_vec, params, *, tile_b=None,
                          compute_dtype=jnp.bfloat16):
    """Runs the fused DeepRelationModule forward pass on TPU via Pallas."""
    B, E = eh_vec.shape
    folded = fold_and_split_params(params, compute_dtype)
    (w1a, w1b, b1, w2a, w2b, b2a, b2b, w3a, w3b, b3) = folded

    if tile_b is None:
        tile_b = B
        for cand in (512, 256, 128):   # MXU-filling batch tiles; grid >= 2 when possible
            if B % cand == 0:
                tile_b = cand
                break
    assert B % tile_b == 0, "batch must be divisible by tile_b"
    assert tile_b == B or tile_b % 8 == 0, "sub-batch tiles must be sublane(8)-aligned"

    grid = (B // tile_b,)

    def param_spec(shape):
        # Whole-parameter blocks, same block every grid step (stay resident).
        return pl.BlockSpec(shape, lambda i: (0, 0))

    matmul_macs = 2 * E * _HIDDEN + _HIDDEN * 2 * E + 2 * E * E
    wbytes = jnp.dtype(compute_dtype).itemsize
    cost = pl.CostEstimate(
        flops=2 * B * matmul_macs,
        transcendentals=0,
        bytes_accessed=int(3 * B * E * 4 + matmul_macs * wbytes + (_HIDDEN + 3 * E) * 4),
    )

    kernel = functools.partial(_deep_relation_kernel, compute_dtype=compute_dtype)

    out = pl.pallas_call(
        kernel,
        out_shape=jax.ShapeDtypeStruct((B, E), jnp.float32),
        grid_spec=pltpu.PrefetchScalarGridSpec(
            num_scalar_prefetch=0,
            grid=grid,
            in_specs=[
                pl.BlockSpec((tile_b, E), lambda i: (i, 0)),   # eh_vec
                pl.BlockSpec((tile_b, E), lambda i: (i, 0)),   # user_vec
                param_spec((E, _HIDDEN)),                      # w1a
                param_spec((E, _HIDDEN)),                      # w1b
                param_spec((1, _HIDDEN)),                      # b1
                param_spec((_HIDDEN, E)),                      # w2a (bn1-folded)
                param_spec((_HIDDEN, E)),                      # w2b (bn1-folded)
                param_spec((1, E)),                            # b2a
                param_spec((1, E)),                            # b2b
                param_spec((E, E)),                            # w3a (bn2-folded)
                param_spec((E, E)),                            # w3b (bn2-folded)
                param_spec((1, E)),                            # b3
            ],
            out_specs=pl.BlockSpec((tile_b, E), lambda i: (i, 0)),
        ),
        compiler_params=pltpu.CompilerParams(
            dimension_semantics=("parallel",),
        ),
        cost_estimate=cost,
    )(eh_vec, user_vec, w1a, w1b, b1, w2a, w2b, b2a, b2b, w3a, w3b, b3)
    return out


def init_params(key, embed_size):
    """Deterministic parameter init matching the module's shapes.

    Linear weights are stored as (in, out) (transpose of PyTorch's (out, in)).
    BatchNorm params/stats get nontrivial deterministic values so the
    normalization math is exercised.
    """
    in_size = 2 * embed_size
    hidden = _HIDDEN
    ks = jax.random.split(key, 5)

    def lin(k, fan_in, fan_out):
        bound = 1.0 / jnp.sqrt(fan_in)
        kw, kb = jax.random.split(k)
        w = jax.random.uniform(kw, (fan_in, fan_out), jnp.float32, -bound, bound)
        b = jax.random.uniform(kb, (1, fan_out), jnp.float32, -bound, bound)
        return w, b

    w1, b1 = lin(ks[0], in_size, hidden)
    w2, b2 = lin(ks[1], hidden, in_size)
    w3, b3 = lin(ks[2], in_size, embed_size)

    def bn(k, n):
        kg, kb, km, kv = jax.random.split(k, 4)
        gamma = 1.0 + 0.1 * jax.random.normal(kg, (1, n), jnp.float32)
        beta = 0.1 * jax.random.normal(kb, (1, n), jnp.float32)
        mean = 0.1 * jax.random.normal(km, (1, n), jnp.float32)
        var = jnp.abs(1.0 + 0.1 * jax.random.normal(kv, (1, n), jnp.float32))
        return gamma, beta, mean, var

    g1, be1, m1, v1 = bn(ks[3], hidden)
    g2, be2, m2, v2 = bn(ks[4], in_size)

    return (w1, b1, g1, be1, m1, v1,
            w2, b2, g2, be2, m2, v2,
            w3, b3)


def reference_forward(eh_vec, user_vec, params):
    """Plain-JAX f32 reference implementing the PyTorch module math exactly."""
    (w1, b1, g1, be1, m1, v1,
     w2, b2, g2, be2, m2, v2,
     w3, b3) = params
    feat = jnp.concatenate([eh_vec, user_vec], axis=-1)
    x = jnp.maximum(feat @ w1 + b1, 0.0)
    x = (x - m1) / jnp.sqrt(v1 + _BN_EPS) * g1 + be1
    x = jnp.maximum(x @ w2 + b2 + feat, 0.0)
    x = (x - m2) / jnp.sqrt(v2 + _BN_EPS) * g2 + be2
    return x @ w3 + b3


def reference_forward_folded(eh_vec, user_vec, folded, compute_dtype):
    """Plain-JAX reference using the same fold/split/cast math as the kernel."""
    (w1a, w1b, b1, w2a, w2b, b2a, b2b, w3a, w3b, b3) = folded
    cd, f32 = compute_dtype, jnp.float32
    h = (jnp.dot(eh_vec.astype(cd), w1a, preferred_element_type=f32)
         + jnp.dot(user_vec.astype(cd), w1b, preferred_element_type=f32) + b1)
    h = jnp.maximum(h, 0.0)
    ya = jnp.dot(h.astype(cd), w2a, preferred_element_type=f32) + b2a + eh_vec
    yb = jnp.dot(h.astype(cd), w2b, preferred_element_type=f32) + b2b + user_vec
    ya = jnp.maximum(ya, 0.0)
    yb = jnp.maximum(yb, 0.0)
    return (jnp.dot(ya.astype(cd), w3a, preferred_element_type=f32)
            + jnp.dot(yb.astype(cd), w3b, preferred_element_type=f32) + b3)


if __name__ == "__main__":
    embed_size = 32
    batch = 256   # tile_b=128 -> grid (2,): exercises pipelining and both v7x TCs

    key = jax.random.PRNGKey(0)
    k_eh, k_user, k_params = jax.random.split(key, 3)

    eh_vec = jax.random.normal(k_eh, (batch, embed_size), jnp.float32)
    user_vec = jax.random.normal(k_user, (batch, embed_size), jnp.float32)
    params = init_params(k_params, embed_size)

    out = deep_relation_forward(eh_vec, user_vec, params)
    out = jax.block_until_ready(out)
    assert out.shape == (batch, embed_size)

    # 1) Kernel vs a plain-JAX reference with identical fold + bf16-cast math
    #    (validates the Pallas kernel itself; only accumulation order differs).
    folded = fold_and_split_params(params, jnp.bfloat16)
    ref_kernel_math = reference_forward_folded(eh_vec, user_vec, folded, jnp.bfloat16)
    assert jnp.allclose(out, ref_kernel_math, atol=2e-3, rtol=2e-3), \
        "mismatch vs folded/bf16 reference"

    # 2) Kernel vs exact eval-mode module math in f32 (bounded by bf16 matmul
    #    rounding; validates the BN fold / concat-elimination semantics).
    ref_module = reference_forward(eh_vec, user_vec, params)
    assert jnp.allclose(out, ref_module, atol=5e-2, rtol=5e-2), \
        "mismatch vs f32 module reference"

    print("KERNEL_OK")
</pallas_src>

<mosaic_0001>
module attributes {stable_mosaic.version = 11 : i64} {
  func.func @_deep_relation_kernel(%arg0: i32, %arg1: memref<256x32xf32, #tpu.memory_space<vmem>>, %arg2: memref<256x32xf32, #tpu.memory_space<vmem>>, %arg3: memref<32x256xbf16, #tpu.memory_space<vmem>>, %arg4: memref<32x256xbf16, #tpu.memory_space<vmem>>, %arg5: memref<1x256xf32, #tpu.memory_space<vmem>>, %arg6: memref<256x32xbf16, #tpu.memory_space<vmem>>, %arg7: memref<256x32xbf16, #tpu.memory_space<vmem>>, %arg8: memref<1x32xf32, #tpu.memory_space<vmem>>, %arg9: memref<1x32xf32, #tpu.memory_space<vmem>>, %arg10: memref<32x32xbf16, #tpu.memory_space<vmem>>, %arg11: memref<32x32xbf16, #tpu.memory_space<vmem>>, %arg12: memref<1x32xf32, #tpu.memory_space<vmem>>, %arg13: memref<256x32xf32, #tpu.memory_space<vmem>>) attributes {dimension_semantics = [#tpu.dimension_semantics<parallel>], iteration_bounds = array<i64: 1>, scalar_prefetch = 0 : i64, scratch_operands = 0 : i64, tpu.core_type = #tpu.core_type<tc>, window_params = [{transform_indices = @transform_0, window_bounds = array<i64: 256, 32>}, {transform_indices = @transform_1, window_bounds = array<i64: 256, 32>}, {pipeline_mode = #tpu.pipeline_mode<synchronous>, transform_indices = @transform_2, window_bounds = array<i64: 32, 256>}, {pipeline_mode = #tpu.pipeline_mode<synchronous>, transform_indices = @transform_3, window_bounds = array<i64: 32, 256>}, {pipeline_mode = #tpu.pipeline_mode<synchronous>, transform_indices = @transform_4, window_bounds = array<i64: 1, 256>}, {pipeline_mode = #tpu.pipeline_mode<synchronous>, transform_indices = @transform_5, window_bounds = array<i64: 256, 32>}, {pipeline_mode = #tpu.pipeline_mode<synchronous>, transform_indices = @transform_6, window_bounds = array<i64: 256, 32>}, {pipeline_mode = #tpu.pipeline_mode<synchronous>, transform_indices = @transform_7, window_bounds = array<i64: 1, 32>}, {pipeline_mode = #tpu.pipeline_mode<synchronous>, transform_indices = @transform_8, window_bounds = array<i64: 1, 32>}, {pipeline_mode = #tpu.pipeline_mode<synchronous>, transform_indices = @transform_9, window_bounds = array<i64: 32, 32>}, {pipeline_mode = #tpu.pipeline_mode<synchronous>, transform_indices = @transform_10, window_bounds = array<i64: 32, 32>}, {pipeline_mode = #tpu.pipeline_mode<synchronous>, transform_indices = @transform_11, window_bounds = array<i64: 1, 32>}, {transform_indices = @transform_12, window_bounds = array<i64: 256, 32>}]} {
    %c0 = arith.constant 0 : index
    %c0_0 = arith.constant 0 : index
    %0 = vector.load %arg1[%c0, %c0_0] : memref<256x32xf32, #tpu.memory_space<vmem>>, vector<256x32xf32>
    %c0_1 = arith.constant 0 : index
    %c0_2 = arith.constant 0 : index
    %1 = vector.load %arg2[%c0_1, %c0_2] : memref<256x32xf32, #tpu.memory_space<vmem>>, vector<256x32xf32>
    %2 = arith.truncf %0 : vector<256x32xf32> to vector<256x32xbf16>
    %3 = arith.truncf %1 : vector<256x32xf32> to vector<256x32xbf16>
    %c0_3 = arith.constant 0 : index
    %c0_4 = arith.constant 0 : index
    %4 = vector.load %arg3[%c0_3, %c0_4] : memref<32x256xbf16, #tpu.memory_space<vmem>>, vector<32x256xbf16>
    %cst = arith.constant dense<0.000000e+00> : vector<256x256xf32>
    %5 = tpu.matmul %2, %4, %cst {dimension_numbers = #tpu.dot_dimension_numbers<[1], [0], [0], [1], [0, 0, 1, 1], [], []>} : vector<256x32xbf16>, vector<32x256xbf16>, vector<256x256xf32> -> vector<256x256xf32>
    %c0_5 = arith.constant 0 : index
    %c0_6 = arith.constant 0 : index
    %6 = vector.load %arg4[%c0_5, %c0_6] : memref<32x256xbf16, #tpu.memory_space<vmem>>, vector<32x256xbf16>
    %cst_7 = arith.constant dense<0.000000e+00> : vector<256x256xf32>
    %7 = tpu.matmul %3, %6, %cst_7 {dimension_numbers = #tpu.dot_dimension_numbers<[1], [0], [0], [1], [0, 0, 1, 1], [], []>} : vector<256x32xbf16>, vector<32x256xbf16>, vector<256x256xf32> -> vector<256x256xf32>
    %8 = arith.addf %5, %7 : vector<256x256xf32>
    %c0_8 = arith.constant 0 : index
    %c0_9 = arith.constant 0 : index
    %9 = vector.load %arg5[%c0_8, %c0_9] : memref<1x256xf32, #tpu.memory_space<vmem>>, vector<1x256xf32>
    %10 = vector.broadcast %9 : vector<1x256xf32> to vector<256x256xf32>
    %11 = arith.addf %8, %10 : vector<256x256xf32>
    %cst_10 = arith.constant 0.000000e+00 : f32
    %12 = vector.broadcast %cst_10 : f32 to vector<256x256xf32>
    %13 = arith.maximumf %11, %12 : vector<256x256xf32>
    %14 = arith.truncf %13 : vector<256x256xf32> to vector<256x256xbf16>
    %c0_11 = arith.constant 0 : index
    %c0_12 = arith.constant 0 : index
    %15 = vector.load %arg6[%c0_11, %c0_12] : memref<256x32xbf16, #tpu.memory_space<vmem>>, vector<256x32xbf16>
    %cst_13 = arith.constant dense<0.000000e+00> : vector<256x32xf32>
    %16 = tpu.matmul %14, %15, %cst_13 {dimension_numbers = #tpu.dot_dimension_numbers<[1], [0], [0], [1], [0, 0, 1, 1], [], []>} : vector<256x256xbf16>, vector<256x32xbf16>, vector<256x32xf32> -> vector<256x32xf32>
    %c0_14 = arith.constant 0 : index
    %c0_15 = arith.constant 0 : index
    %17 = vector.load %arg8[%c0_14, %c0_15] : memref<1x32xf32, #tpu.memory_space<vmem>>, vector<1x32xf32>
    %18 = vector.broadcast %17 : vector<1x32xf32> to vector<256x32xf32>
    %19 = arith.addf %16, %18 : vector<256x32xf32>
    %20 = arith.addf %19, %0 : vector<256x32xf32>
    %c0_16 = arith.constant 0 : index
    %c0_17 = arith.constant 0 : index
    %21 = vector.load %arg7[%c0_16, %c0_17] : memref<256x32xbf16, #tpu.memory_space<vmem>>, vector<256x32xbf16>
    %cst_18 = arith.constant dense<0.000000e+00> : vector<256x32xf32>
    %22 = tpu.matmul %14, %21, %cst_18 {dimension_numbers = #tpu.dot_dimension_numbers<[1], [0], [0], [1], [0, 0, 1, 1], [], []>} : vector<256x256xbf16>, vector<256x32xbf16>, vector<256x32xf32> -> vector<256x32xf32>
    %c0_19 = arith.constant 0 : index
    %c0_20 = arith.constant 0 : index
    %23 = vector.load %arg9[%c0_19, %c0_20] : memref<1x32xf32, #tpu.memory_space<vmem>>, vector<1x32xf32>
    %24 = vector.broadcast %23 : vector<1x32xf32> to vector<256x32xf32>
    %25 = arith.addf %22, %24 : vector<256x32xf32>
    %26 = arith.addf %25, %1 : vector<256x32xf32>
    %cst_21 = arith.constant 0.000000e+00 : f32
    %27 = vector.broadcast %cst_21 : f32 to vector<256x32xf32>
    %28 = arith.maximumf %20, %27 : vector<256x32xf32>
    %cst_22 = arith.constant 0.000000e+00 : f32
    %29 = vector.broadcast %cst_22 : f32 to vector<256x32xf32>
    %30 = arith.maximumf %26, %29 : vector<256x32xf32>
    %31 = arith.truncf %28 : vector<256x32xf32> to vector<256x32xbf16>
    %c0_23 = arith.constant 0 : index
    %c0_24 = arith.constant 0 : index
    %32 = vector.load %arg10[%c0_23, %c0_24] : memref<32x32xbf16, #tpu.memory_space<vmem>>, vector<32x32xbf16>
    %cst_25 = arith.constant dense<0.000000e+00> : vector<256x32xf32>
    %33 = tpu.matmul %31, %32, %cst_25 {dimension_numbers = #tpu.dot_dimension_numbers<[1], [0], [0], [1], [0, 0, 1, 1], [], []>} : vector<256x32xbf16>, vector<32x32xbf16>, vector<256x32xf32> -> vector<256x32xf32>
    %34 = arith.truncf %30 : vector<256x32xf32> to vector<256x32xbf16>
    %c0_26 = arith.constant 0 : index
    %c0_27 = arith.constant 0 : index
    %35 = vector.load %arg11[%c0_26, %c0_27] : memref<32x32xbf16, #tpu.memory_space<vmem>>, vector<32x32xbf16>
    %cst_28 = arith.constant dense<0.000000e+00> : vector<256x32xf32>
    %36 = tpu.matmul %34, %35, %cst_28 {dimension_numbers = #tpu.dot_dimension_numbers<[1], [0], [0], [1], [0, 0, 1, 1], [], []>} : vector<256x32xbf16>, vector<32x32xbf16>, vector<256x32xf32> -> vector<256x32xf32>
    %37 = arith.addf %33, %36 : vector<256x32xf32>
    %c0_29 = arith.constant 0 : index
    %c0_30 = arith.constant 0 : index
    %38 = vector.load %arg12[%c0_29, %c0_30] : memref<1x32xf32, #tpu.memory_space<vmem>>, vector<1x32xf32>
    %39 = vector.broadcast %38 : vector<1x32xf32> to vector<256x32xf32>
    %40 = arith.addf %37, %39 : vector<256x32xf32>
    %c0_31 = arith.constant 0 : index
    %c0_32 = arith.constant 0 : index
    %41 = vector.load %arg13[%c0_31, %c0_32] : memref<256x32xf32, #tpu.memory_space<vmem>>, vector<256x32xf32>
    tpu.vector_store %arg13[%c0_31, %c0_32], %40 {strides = array<i32>} : memref<256x32xf32, #tpu.memory_space<vmem>>, vector<256x32xf32>,
    return
  }
  func.func @transform_0(%arg0: i32) -> (i32, i32) {
    %c0_i32 = arith.constant 0 : i32
    %c0_i32_0 = arith.constant 0 : i32
    return %arg0, %c0_i32 : i32, i32
  }
  func.func @transform_1(%arg0: i32) -> (i32, i32) {
    %c0_i32 = arith.constant 0 : i32
    %c0_i32_0 = arith.constant 0 : i32
    return %arg0, %c0_i32 : i32, i32
  }
  func.func @transform_2(%arg0: i32) -> (i32, i32) {
    %c0_i32 = arith.constant 0 : i32
    %c0_i32_0 = arith.constant 0 : i32
    %c0_i32_1 = arith.constant 0 : i32
    return %c0_i32, %c0_i32_0 : i32, i32
  }
  func.func @transform_3(%arg0: i32) -> (i32, i32) {
    %c0_i32 = arith.constant 0 : i32
    %c0_i32_0 = arith.constant 0 : i32
    %c0_i32_1 = arith.constant 0 : i32
    return %c0_i32, %c0_i32_0 : i32, i32
  }
  func.func @transform_4(%arg0: i32) -> (i32, i32) {
    %c0_i32 = arith.constant 0 : i32
    %c0_i32_0 = arith.constant 0 : i32
    %c0_i32_1 = arith.constant 0 : i32
    return %c0_i32, %c0_i32_0 : i32, i32
  }
  func.func @transform_5(%arg0: i32) -> (i32, i32) {
    %c0_i32 = arith.constant 0 : i32
    %c0_i32_0 = arith.constant 0 : i32
    %c0_i32_1 = arith.constant 0 : i32
    return %c0_i32, %c0_i32_0 : i32, i32
  }
  func.func @transform_6(%arg0: i32) -> (i32, i32) {
    %c0_i32 = arith.constant 0 : i32
    %c0_i32_0 = arith.constant 0 : i32
    %c0_i32_1 = arith.constant 0 : i32
    return %c0_i32, %c0_i32_0 : i32, i32
  }
  func.func @transform_7(%arg0: i32) -> (i32, i32) {
    %c0_i32 = arith.constant 0 : i32
    %c0_i32_0 = arith.constant 0 : i32
    %c0_i32_1 = arith.constant 0 : i32
    return %c0_i32, %c0_i32_0 : i32, i32
  }
  func.func @transform_8(%arg0: i32) -> (i32, i32) {
    %c0_i32 = arith.constant 0 : i32
    %c0_i32_0 = arith.constant 0 : i32
    %c0_i32_1 = arith.constant 0 : i32
    return %c0_i32, %c0_i32_0 : i32, i32
  }
  func.func @transform_9(%arg0: i32) -> (i32, i32) {
    %c0_i32 = arith.constant 0 : i32
    %c0_i32_0 = arith.constant 0 : i32
    %c0_i32_1 = arith.constant 0 : i32
    return %c0_i32, %c0_i32_0 : i32, i32
  }
  func.func @transform_10(%arg0: i32) -> (i32, i32) {
    %c0_i32 = arith.constant 0 : i32
    %c0_i32_0 = arith.constant 0 : i32
    %c0_i32_1 = arith.constant 0 : i32
    return %c0_i32, %c0_i32_0 : i32, i32
  }
  func.func @transform_11(%arg0: i32) -> (i32, i32) {
    %c0_i32 = arith.constant 0 : i32
    %c0_i32_0 = arith.constant 0 : i32
    %c0_i32_1 = arith.constant 0 : i32
    return %c0_i32, %c0_i32_0 : i32, i32
  }
  func.func @transform_12(%arg0: i32) -> (i32, i32) {
    %c0_i32 = arith.constant 0 : i32
    %c0_i32_0 = arith.constant 0 : i32
    return %arg0, %c0_i32 : i32, i32
  }
}

</mosaic_0001>

<llo_original>
// kernel: tpu_custom_call.1
$region0: #{tpu_custom_call.1}
  #allocation0 [shape = 'u32[]', space=smem, size = 0x4, offset = 0x4, fixed_abs, tag = 'smem constant byte address 0x4 - core index']
  #allocation1 [shape = 'u32[72,128]{1,0:T(1,128)}', space=vmem, size = 0x9000, scoped, tag = 'internal scratch']
  %s0 = inlined_call_operand.vmem [shape: f32[256,32], index: 0, kind: input, shape index: {}]
  %s1 = inlined_call_operand.vmem [shape: f32[256,32], index: 1, kind: input, shape index: {}]
  %s2 = inlined_call_operand.vmem [shape: bf16[32,256], index: 2, kind: input, shape index: {}]
  %s3 = inlined_call_operand.vmem [shape: bf16[32,256], index: 3, kind: input, shape index: {}]
  %s4 = inlined_call_operand.vmem [shape: f32[1,256], index: 4, kind: input, shape index: {}]
  %s5 = inlined_call_operand.vmem [shape: bf16[256,32], index: 5, kind: input, shape index: {}]
  %s6 = inlined_call_operand.vmem [shape: bf16[256,32], index: 6, kind: input, shape index: {}]
  %s7 = inlined_call_operand.vmem [shape: f32[1,32], index: 7, kind: input, shape index: {}]
  %s8 = inlined_call_operand.vmem [shape: f32[1,32], index: 8, kind: input, shape index: {}]
  %s9 = inlined_call_operand.vmem [shape: bf16[32,32], index: 9, kind: input, shape index: {}]
  %s10 = inlined_call_operand.vmem [shape: bf16[32,32], index: 10, kind: input, shape index: {}]
  %s11 = inlined_call_operand.vmem [shape: f32[1,32], index: 11, kind: input, shape index: {}]
  %s12 = inlined_call_operand.vmem [shape: f32[256,32], index: 12, kind: output, shape index: {}]
  %s13 = sld [smem:[#allocation0]]
  $region58: #{tpu_custom_call.1} parent=0
    _
  %s15 = ssub.s32 1, %s13
  %s16 = scalar_select 0, %s15, %s13
  // Predicated region
  $region2: #{tpu_custom_call.1} parent=0 // pred_check
    _
  $region3: #{tpu_custom_call.1} parent=0 // pred_check_branch
    %18 = sbr.rel (0) target = $region5
  $region4: #{tpu_custom_call.1} parent=0 // pred_region
    _
  $region5: #{tpu_custom_call.1} parent=0 // pred_fallthru
    _
  // Predicated region
  $region6: #{tpu_custom_call.1} parent=0 // pred_check
    _
  $region7: #{tpu_custom_call.1} parent=0 // pred_check_branch
    %20 = sbr.rel (0) target = $region9
  $region8: #{tpu_custom_call.1} parent=0 // pred_region
    _
  $region9: #{tpu_custom_call.1} parent=0 // pred_fallthru
    _
  // Predicated region
  $region10: #{tpu_custom_call.1} parent=0 // pred_check
    _
  $region11: #{tpu_custom_call.1} parent=0 // pred_check_branch
    %22 = sbr.rel (0) target = $region13
  $region12: #{tpu_custom_call.1} parent=0 // pred_region
    _
  $region13: #{tpu_custom_call.1} parent=0 // pred_fallthru
    _
  // Predicated region
  $region14: #{tpu_custom_call.1} parent=0 // pred_check
    _
  $region15: #{tpu_custom_call.1} parent=0 // pred_check_branch
    %24 = sbr.rel (0) target = $region17
  $region16: #{tpu_custom_call.1} parent=0 // pred_region
    _
  $region17: #{tpu_custom_call.1} parent=0 // pred_fallthru
    _
  // Predicated region
  $region18: #{tpu_custom_call.1} parent=0 // pred_check
    _
  $region19: #{tpu_custom_call.1} parent=0 // pred_check_branch
    %26 = sbr.rel (0) target = $region21
  $region20: #{tpu_custom_call.1} parent=0 // pred_region
    _
  $region21: #{tpu_custom_call.1} parent=0 // pred_fallthru
    _
  // Predicated region
  $region22: #{tpu_custom_call.1} parent=0 // pred_check
    _
  $region23: #{tpu_custom_call.1} parent=0 // pred_check_branch
    %28 = sbr.rel (0) target = $region25
  $region24: #{tpu_custom_call.1} parent=0 // pred_region
    _
  $region25: #{tpu_custom_call.1} parent=0 // pred_fallthru
    _
  // Predicated region
  $region26: #{tpu_custom_call.1} parent=0 // pred_check
    _
  $region27: #{tpu_custom_call.1} parent=0 // pred_check_branch
    %30 = sbr.rel (0) target = $region29
  $region28: #{tpu_custom_call.1} parent=0 // pred_region
    _
  $region29: #{tpu_custom_call.1} parent=0 // pred_fallthru
    _
  // Predicated region
  $region30: #{tpu_custom_call.1} parent=0 // pred_check
    _
  $region31: #{tpu_custom_call.1} parent=0 // pred_check_branch
    %32 = sbr.rel (0) target = $region33
  $region32: #{tpu_custom_call.1} parent=0 // pred_region
    _
  $region33: #{tpu_custom_call.1} parent=0 // pred_fallthru
    _
  // Predicated region
  $region34: #{tpu_custom_call.1} parent=0 // pred_check
    _
  $region35: #{tpu_custom_call.1} parent=0 // pred_check_branch
    %34 = sbr.rel (0) target = $region37
  $region36: #{tpu_custom_call.1} parent=0 // pred_region
    _
  $region37: #{tpu_custom_call.1} parent=0 // pred_fallthru
    _
  // Predicated region
  $region38: #{tpu_custom_call.1} parent=0 // pred_check
    _
  $region39: #{tpu_custom_call.1} parent=0 // pred_check_branch
    %36 = sbr.rel (0) target = $region41
  $region40: #{tpu_custom_call.1} parent=0 // pred_region
    _
  $region41: #{tpu_custom_call.1} parent=0 // pred_fallthru
    _
  // Predicated region
  $region42: #{tpu_custom_call.1} parent=0 // pred_check
    _
  $region43: #{tpu_custom_call.1} parent=0 // pred_check_branch
    %38 = sbr.rel (0) target = $region45
  $region44: #{tpu_custom_call.1} parent=0 // pred_region
    _
  $region45: #{tpu_custom_call.1} parent=0 // pred_fallthru
    _
  // Predicated region
  $region46: #{tpu_custom_call.1} parent=0 // pred_check
    _
  $region47: #{tpu_custom_call.1} parent=0 // pred_check_branch
    %40 = sbr.rel (0) target = $region49
  $region48: #{tpu_custom_call.1} parent=0 // pred_region
    _
  $region49: #{tpu_custom_call.1} parent=0 // pred_fallthru
    _
  %v42 = vld [vmem:[%s0] sm:$0xff]
  %v43 = vld [vmem:[%s0 + $0x8] sm:$0xff]
  %v44 = vld [vmem:[%s0 + $0x10] sm:$0xff]
  %v45 = vld [vmem:[%s0 + $0x18] sm:$0xff]
  %v46 = vld [vmem:[%s0 + $0x20] sm:$0xff]
  %v47 = vld [vmem:[%s0 + $0x28] sm:$0xff]
  %v48 = vld [vmem:[%s0 + $0x30] sm:$0xff]
  %v49 = vld [vmem:[%s0 + $0x38] sm:$0xff]
  %v50 = vld [vmem:[%s0 + $0x40] sm:$0xff]
  %v51 = vld [vmem:[%s0 + $0x48] sm:$0xff]
  %v52 = vld [vmem:[%s0 + $0x50] sm:$0xff]
  %v53 = vld [vmem:[%s0 + $0x58] sm:$0xff]
  %v54 = vld [vmem:[%s0 + $0x60] sm:$0xff]
  %v55 = vld [vmem:[%s0 + $0x68] sm:$0xff]
  %v56 = vld [vmem:[%s0 + $0x70] sm:$0xff]
  %v57 = vld [vmem:[%s0 + $0x78] sm:$0xff]
  %v58 = vld [vmem:[%s0 + $0x80] sm:$0xff]
  %v59 = vld [vmem:[%s0 + $0x88] sm:$0xff]
  %v60 = vld [vmem:[%s0 + $0x90] sm:$0xff]
  %v61 = vld [vmem:[%s0 + $0x98] sm:$0xff]
  %v62 = vld [vmem:[%s0 + $0xa0] sm:$0xff]
  %v63 = vld [vmem:[%s0 + $0xa8] sm:$0xff]
  %v64 = vld [vmem:[%s0 + $0xb0] sm:$0xff]
  %v65 = vld [vmem:[%s0 + $0xb8] sm:$0xff]
  %v66 = vld [vmem:[%s0 + $0xc0] sm:$0xff]
  %v67 = vld [vmem:[%s0 + $0xc8] sm:$0xff]
  %v68 = vld [vmem:[%s0 + $0xd0] sm:$0xff]
  %v69 = vld [vmem:[%s0 + $0xd8] sm:$0xff]
  %v70 = vld [vmem:[%s0 + $0xe0] sm:$0xff]
  %v71 = vld [vmem:[%s0 + $0xe8] sm:$0xff]
  %v72 = vld [vmem:[%s0 + $0xf0] sm:$0xff]
  %v73 = vld [vmem:[%s0 + $0xf8] sm:$0xff]
  %v74 = vld [vmem:[%s1] sm:$0xff]
  %v75 = vld [vmem:[%s1 + $0x8] sm:$0xff]
  %v76 = vld [vmem:[%s1 + $0x10] sm:$0xff]
  %v77 = vld [vmem:[%s1 + $0x18] sm:$0xff]
  %v78 = vld [vmem:[%s1 + $0x20] sm:$0xff]
  %v79 = vld [vmem:[%s1 + $0x28] sm:$0xff]
  %v80 = vld [vmem:[%s1 + $0x30] sm:$0xff]
  %v81 = vld [vmem:[%s1 + $0x38] sm:$0xff]
  %v82 = vld [vmem:[%s1 + $0x40] sm:$0xff]
  %v83 = vld [vmem:[%s1 + $0x48] sm:$0xff]
  %v84 = vld [vmem:[%s1 + $0x50] sm:$0xff]
  %v85 = vld [vmem:[%s1 + $0x58] sm:$0xff]
  %v86 = vld [vmem:[%s1 + $0x60] sm:$0xff]
  %v87 = vld [vmem:[%s1 + $0x68] sm:$0xff]
  %v88 = vld [vmem:[%s1 + $0x70] sm:$0xff]
  %v89 = vld [vmem:[%s1 + $0x78] sm:$0xff]
  %v90 = vld [vmem:[%s1 + $0x80] sm:$0xff]
  %v91 = vld [vmem:[%s1 + $0x88] sm:$0xff]
  %v92 = vld [vmem:[%s1 + $0x90] sm:$0xff]
  %v93 = vld [vmem:[%s1 + $0x98] sm:$0xff]
  %v94 = vld [vmem:[%s1 + $0xa0] sm:$0xff]
  %v95 = vld [vmem:[%s1 + $0xa8] sm:$0xff]
  %v96 = vld [vmem:[%s1 + $0xb0] sm:$0xff]
  %v97 = vld [vmem:[%s1 + $0xb8] sm:$0xff]
  %v98 = vld [vmem:[%s1 + $0xc0] sm:$0xff]
  %v99 = vld [vmem:[%s1 + $0xc8] sm:$0xff]
  %v100 = vld [vmem:[%s1 + $0xd0] sm:$0xff]
  %v101 = vld [vmem:[%s1 + $0xd8] sm:$0xff]
  %v102 = vld [vmem:[%s1 + $0xe0] sm:$0xff]
  %v103 = vld [vmem:[%s1 + $0xe8] sm:$0xff]
  %v104 = vld [vmem:[%s1 + $0xf0] sm:$0xff]
  %v105 = vld [vmem:[%s1 + $0xf8] sm:$0xff]
  %v106 = vpack.c.bf16 %v43, %v42
  %v107 = vpack.c.bf16 %v45, %v44
  %v108 = vpack.c.bf16 %v47, %v46
  %v109 = vpack.c.bf16 %v49, %v48
  %v110 = vpack.c.bf16 %v51, %v50
  %v111 = vpack.c.bf16 %v53, %v52
  %v112 = vpack.c.bf16 %v55, %v54
  %v113 = vpack.c.bf16 %v57, %v56
  %v114 = vpack.c.bf16 %v59, %v58
  %v115 = vpack.c.bf16 %v61, %v60
  %v116 = vpack.c.bf16 %v63, %v62
  %v117 = vpack.c.bf16 %v65, %v64
  %v118 = vpack.c.bf16 %v67, %v66
  %v119 = vpack.c.bf16 %v69, %v68
  %v120 = vpack.c.bf16 %v71, %v70
  %v121 = vpack.c.bf16 %v73, %v72
  %v122 = vpack.c.bf16 %v75, %v74
  %v123 = vpack.c.bf16 %v77, %v76
  %v124 = vpack.c.bf16 %v79, %v78
  %v125 = vpack.c.bf16 %v81, %v80
  %v126 = vpack.c.bf16 %v83, %v82
  %v127 = vpack.c.bf16 %v85, %v84
  %v128 = vpack.c.bf16 %v87, %v86
  %v129 = vpack.c.bf16 %v89, %v88
  %v130 = vpack.c.bf16 %v91, %v90
  %v131 = vpack.c.bf16 %v93, %v92
  %v132 = vpack.c.bf16 %v95, %v94
  %v133 = vpack.c.bf16 %v97, %v96
  %v134 = vpack.c.bf16 %v99, %v98
  %v135 = vpack.c.bf16 %v101, %v100
  %v136 = vpack.c.bf16 %v103, %v102
  %v137 = vpack.c.bf16 %v105, %v104
  %v138 = vld [vmem:[%s2] sm:$0xff]
  %v139 = vld [vmem:[%s2 + $0x8] sm:$0xff]
  %v140 = vld [vmem:[%s2 + $0x10] sm:$0xff]
  %v141 = vld [vmem:[%s2 + $0x18] sm:$0xff]
  %v142 = vld [vmem:[%s3] sm:$0xff]
  %v143 = vld [vmem:[%s3 + $0x8] sm:$0xff]
  %v144 = vld [vmem:[%s3 + $0x10] sm:$0xff]
  %v145 = vld [vmem:[%s3 + $0x18] sm:$0xff]
  %v150 = vunpack.c.l.b16 %v142
  %v151 = vunpack.c.h.b16 %v142
  %v152 = vunpack.c.l.b16 %v143
  %v153 = vunpack.c.h.b16 %v143
  %v154 = vunpack.c.l.b16 %v144
  %v155 = vunpack.c.h.b16 %v144
  %v156 = vunpack.c.l.b16 %v145
  %v157 = vunpack.c.h.b16 %v145
  %v158 = vpack.c.b16 %v152, %v150
  %v159 = vpack.c.b16 %v153, %v151
  %v160 = vpack.c.b16 %v156, %v154
  %v161 = vpack.c.b16 %v157, %v155
  %vm166 = vcmask 261120
  %v168 = vsel %vm166, %v122, 0
  %v171 = vsel %vm166, %v123, 0
  %v174 = vsel %vm166, %v124, 0
  %v177 = vsel %vm166, %v125, 0
  %v180 = vsel %vm166, %v126, 0
  %v183 = vsel %vm166, %v127, 0
  %v186 = vsel %vm166, %v128, 0
  %v189 = vsel %vm166, %v129, 0
  %v192 = vsel %vm166, %v130, 0
  %v195 = vsel %vm166, %v131, 0
  %v198 = vsel %vm166, %v132, 0
  %v201 = vsel %vm166, %v133, 0
  %v204 = vsel %vm166, %v134, 0
  %v207 = vsel %vm166, %v135, 0
  %v210 = vsel %vm166, %v136, 0
  %v213 = vsel %vm166, %v137, 0
  %215 = vmatpush.bf16.msra.mxu0 0
  %216 = vmatpush.bf16.msra.mxu0 0
  %217 = vmatpush.bf16.msra.mxu0 0
  %218 = vmatpush.bf16.msra.mxu0 0
  %219 = vmatpush.bf16.msra.mxu0 0
  %220 = vmatpush.bf16.msra.mxu0 0
  %221 = vmatpush.bf16.msra.mxu0 %v160
  %222 = vmatpush.bf16.msra.mxu0 %v158
  %223 = vmatmul.bf16.gmra.mxu0 %v168
  %v224 = vpop.f32.mrf.mxu0
  %v225 = vadd.f32 0.0, %v224
  %v226 = vpop.f32.mrf.mxu0
  %v227 = vadd.f32 0.0, %v226
  %228 = vmatmul.bf16.gmra.mxu0 %v171
  %v229 = vpop.f32.mrf.mxu0
  %v230 = vadd.f32 0.0, %v229
  %v231 = vpop.f32.mrf.mxu0
  %v232 = vadd.f32 0.0, %v231
  %233 = vmatmul.bf16.gmra.mxu0 %v174
  %v234 = vpop.f32.mrf.mxu0
  %v235 = vadd.f32 0.0, %v234
  %v236 = vpop.f32.mrf.mxu0
  %v237 = vadd.f32 0.0, %v236
  %238 = vmatmul.bf16.gmra.mxu0 %v177
  %v239 = vpop.f32.mrf.mxu0
  %v240 = vadd.f32 0.0, %v239
  %v241 = vpop.f32.mrf.mxu0
  %v242 = vadd.f32 0.0, %v241
  %243 = vmatmul.bf16.gmra.mxu0 %v180
  %v244 = vpop.f32.mrf.mxu0
  %v245 = vadd.f32 0.0, %v244
  %v246 = vpop.f32.mrf.mxu0
  %v247 = vadd.f32 0.0, %v246
  %248 = vmatmul.bf16.gmra.mxu0 %v183
  %v249 = vpop.f32.mrf.mxu0
  %v250 = vadd.f32 0.0, %v249
  %v251 = vpop.f32.mrf.mxu0
  %v252 = vadd.f32 0.0, %v251
  %253 = vmatmul.bf16.gmra.mxu0 %v186
  %v254 = vpop.f32.mrf.mxu0
  %v255 = vadd.f32 0.0, %v254
  %v256 = vpop.f32.mrf.mxu0
  %v257 = vadd.f32 0.0, %v256
  %258 = vmatmul.bf16.gmra.mxu0 %v189
  %v259 = vpop.f32.mrf.mxu0
  %v260 = vadd.f32 0.0, %v259
  %v261 = vpop.f32.mrf.mxu0
  %v262 = vadd.f32 0.0, %v261
  %263 = vmatmul.bf16.gmra.mxu0 %v192
  %v264 = vpop.f32.mrf.mxu0
  %v265 = vadd.f32 0.0, %v264
  %v266 = vpop.f32.mrf.mxu0
  %v267 = vadd.f32 0.0, %v266
  %268 = vmatmul.bf16.gmra.mxu0 %v195
  %v269 = vpop.f32.mrf.mxu0
  %v270 = vadd.f32 0.0, %v269
  %v271 = vpop.f32.mrf.mxu0
  %v272 = vadd.f32 0.0, %v271
  %273 = vmatmul.bf16.gmra.mxu0 %v198
  %v274 = vpop.f32.mrf.mxu0
  %v275 = vadd.f32 0.0, %v274
  %v276 = vpop.f32.mrf.mxu0
  %v277 = vadd.f32 0.0, %v276
  %278 = vmatmul.bf16.gmra.mxu0 %v201
  %v279 = vpop.f32.mrf.mxu0
  %v280 = vadd.f32 0.0, %v279
  %v281 = vpop.f32.mrf.mxu0
  %v282 = vadd.f32 0.0, %v281
  %283 = vmatmul.bf16.gmra.mxu0 %v204
  %v284 = vpop.f32.mrf.mxu0
  %v285 = vadd.f32 0.0, %v284
  %v286 = vpop.f32.mrf.mxu0
  %v287 = vadd.f32 0.0, %v286
  %288 = vmatmul.bf16.gmra.mxu0 %v207
  %v289 = vpop.f32.mrf.mxu0
  %v290 = vadd.f32 0.0, %v289
  %v291 = vpop.f32.mrf.mxu0
  %v292 = vadd.f32 0.0, %v291
  %293 = vmatmul.bf16.gmra.mxu0 %v210
  %v294 = vpop.f32.mrf.mxu0
  %v295 = vadd.f32 0.0, %v294
  %v296 = vpop.f32.mrf.mxu0
  %v297 = vadd.f32 0.0, %v296
  %298 = vmatmul.bf16.gmra.mxu0 %v213
  %v299 = vpop.f32.mrf.mxu0
  %v300 = vadd.f32 0.0, %v299
  %v301 = vpop.f32.mrf.mxu0
  %v302 = vadd.f32 0.0, %v301
  %303 = vdwg.mxu0
  %304 = vmatpush.bf16.msra.mxu0 0
  %305 = vmatpush.bf16.msra.mxu0 0
  %306 = vmatpush.bf16.msra.mxu0 0
  %307 = vmatpush.bf16.msra.mxu0 0
  %308 = vmatpush.bf16.msra.mxu0 0
  %309 = vmatpush.bf16.msra.mxu0 0
  %310 = vmatpush.bf16.msra.mxu0 %v161
  %311 = vmatpush.bf16.msra.mxu0 %v159
  %312 = vmatmul.bf16.gmra.mxu0 %v168
  %v313 = vpop.f32.mrf.mxu0
  %v314 = vadd.f32 0.0, %v313
  %v315 = vpop.f32.mrf.mxu0
  %v316 = vadd.f32 0.0, %v315
  %317 = vmatmul.bf16.gmra.mxu0 %v171
  %v318 = vpop.f32.mrf.mxu0
  %v319 = vadd.f32 0.0, %v318
  %v320 = vpop.f32.mrf.mxu0
  %v321 = vadd.f32 0.0, %v320
  %322 = vmatmul.bf16.gmra.mxu0 %v174
  %v323 = vpop.f32.mrf.mxu0
  %v324 = vadd.f32 0.0, %v323
  %v325 = vpop.f32.mrf.mxu0
  %v326 = vadd.f32 0.0, %v325
  %327 = vmatmul.bf16.gmra.mxu0 %v177
  %v328 = vpop.f32.mrf.mxu0
  %v329 = vadd.f32 0.0, %v328
  %v330 = vpop.f32.mrf.mxu0
  %v331 = vadd.f32 0.0, %v330
  %332 = vmatmul.bf16.gmra.mxu0 %v180
  %v333 = vpop.f32.mrf.mxu0
  %v334 = vadd.f32 0.0, %v333
  %v335 = vpop.f32.mrf.mxu0
  %v336 = vadd.f32 0.0, %v335
  %337 = vmatmul.bf16.gmra.mxu0 %v183
  %v338 = vpop.f32.mrf.mxu0
  %v339 = vadd.f32 0.0, %v338
  %v340 = vpop.f32.mrf.mxu0
  %v341 = vadd.f32 0.0, %v340
  %342 = vmatmul.bf16.gmra.mxu0 %v186
  %v343 = vpop.f32.mrf.mxu0
  %v344 = vadd.f32 0.0, %v343
  %v345 = vpop.f32.mrf.mxu0
  %v346 = vadd.f32 0.0, %v345
  %347 = vmatmul.bf16.gmra.mxu0 %v189
  %v348 = vpop.f32.mrf.mxu0
  %v349 = vadd.f32 0.0, %v348
  %v350 = vpop.f32.mrf.mxu0
  %v351 = vadd.f32 0.0, %v350
  %352 = vmatmul.bf16.gmra.mxu0 %v192
  %v353 = vpop.f32.mrf.mxu0
  %v354 = vadd.f32 0.0, %v353
  %v355 = vpop.f32.mrf.mxu0
  %v356 = vadd.f32 0.0, %v355
  %357 = vmatmul.bf16.gmra.mxu0 %v195
  %v358 = vpop.f32.mrf.mxu0
  %v359 = vadd.f32 0.0, %v358
  %v360 = vpop.f32.mrf.mxu0
  %v361 = vadd.f32 0.0, %v360
  %362 = vmatmul.bf16.gmra.mxu0 %v198
  %v363 = vpop.f32.mrf.mxu0
  %v364 = vadd.f32 0.0, %v363
  %v365 = vpop.f32.mrf.mxu0
  %v366 = vadd.f32 0.0, %v365
  %367 = vmatmul.bf16.gmra.mxu0 %v201
  %v368 = vpop.f32.mrf.mxu0
  %v369 = vadd.f32 0.0, %v368
  %v370 = vpop.f32.mrf.mxu0
  %v371 = vadd.f32 0.0, %v370
  %372 = vmatmul.bf16.gmra.mxu0 %v204
  %v373 = vpop.f32.mrf.mxu0
  %v374 = vadd.f32 0.0, %v373
  %v375 = vpop.f32.mrf.mxu0
  %v376 = vadd.f32 0.0, %v375
  %377 = vmatmul.bf16.gmra.mxu0 %v207
  %v378 = vpop.f32.mrf.mxu0
  %v379 = vadd.f32 0.0, %v378
  %v380 = vpop.f32.mrf.mxu0
  %v381 = vadd.f32 0.0, %v380
  %382 = vmatmul.bf16.gmra.mxu0 %v210
  %v383 = vpop.f32.mrf.mxu0
  %v384 = vadd.f32 0.0, %v383
  %v385 = vpop.f32.mrf.mxu0
  %v386 = vadd.f32 0.0, %v385
  %387 = vmatmul.bf16.gmra.mxu0 %v213
  %v388 = vpop.f32.mrf.mxu0
  %v389 = vadd.f32 0.0, %v388
  %v390 = vpop.f32.mrf.mxu0
  %v391 = vadd.f32 0.0, %v390
  %392 = vdwg.mxu0
  %v397 = vunpack.c.l.b16 %v138
  %v398 = vunpack.c.h.b16 %v138
  %v399 = vunpack.c.l.b16 %v139
  %v400 = vunpack.c.h.b16 %v139
  %v401 = vunpack.c.l.b16 %v140
  %v402 = vunpack.c.h.b16 %v140
  %v403 = vunpack.c.l.b16 %v141
  %v404 = vunpack.c.h.b16 %v141
  %v405 = vpack.c.b16 %v399, %v397
  %v406 = vpack.c.b16 %v400, %v398
  %v407 = vpack.c.b16 %v403, %v401
  %v408 = vpack.c.b16 %v404, %v402
  %v414 = vsel %vm166, %v106, 0
  %v417 = vsel %vm166, %v107, 0
  %v420 = vsel %vm166, %v108, 0
  %v423 = vsel %vm166, %v109, 0
  %v426 = vsel %vm166, %v110, 0
  %v429 = vsel %vm166, %v111, 0
  %v432 = vsel %vm166, %v112, 0
  %v435 = vsel %vm166, %v113, 0
  %v438 = vsel %vm166, %v114, 0
  %v441 = vsel %vm166, %v115, 0
  %v444 = vsel %vm166, %v116, 0
  %v447 = vsel %vm166, %v117, 0
  %v450 = vsel %vm166, %v118, 0
  %v453 = vsel %vm166, %v119, 0
  %v456 = vsel %vm166, %v120, 0
  %v459 = vsel %vm166, %v121, 0
  %461 = vmatpush.bf16.msra.mxu0 0
  %462 = vmatpush.bf16.msra.mxu0 0
  %463 = vmatpush.bf16.msra.mxu0 0
  %464 = vmatpush.bf16.msra.mxu0 0
  %465 = vmatpush.bf16.msra.mxu0 0
  %466 = vmatpush.bf16.msra.mxu0 0
  %467 = vmatpush.bf16.msra.mxu0 %v407
  %468 = vmatpush.bf16.msra.mxu0 %v405
  %469 = vmatmul.bf16.gmra.mxu0 %v414
  %v470 = vpop.f32.mrf.mxu0
  %v471 = vadd.f32 %v225, %v470
  %v472 = vpop.f32.mrf.mxu0
  %v473 = vadd.f32 %v227, %v472
  %474 = vmatmul.bf16.gmra.mxu0 %v417
  %v475 = vpop.f32.mrf.mxu0
  %v476 = vadd.f32 %v230, %v475
  %v477 = vpop.f32.mrf.mxu0
  %v478 = vadd.f32 %v232, %v477
  %479 = vmatmul.bf16.gmra.mxu0 %v420
  %v480 = vpop.f32.mrf.mxu0
  %v481 = vadd.f32 %v235, %v480
  %v482 = vpop.f32.mrf.mxu0
  %v483 = vadd.f32 %v237, %v482
  %484 = vmatmul.bf16.gmra.mxu0 %v423
  %v485 = vpop.f32.mrf.mxu0
  %v486 = vadd.f32 %v240, %v485
  %v487 = vpop.f32.mrf.mxu0
  %v488 = vadd.f32 %v242, %v487
  %489 = vmatmul.bf16.gmra.mxu0 %v426
  %v490 = vpop.f32.mrf.mxu0
  %v491 = vadd.f32 %v245, %v490
  %v492 = vpop.f32.mrf.mxu0
  %v493 = vadd.f32 %v247, %v492
  %494 = vmatmul.bf16.gmra.mxu0 %v429
  %v495 = vpop.f32.mrf.mxu0
  %v496 = vadd.f32 %v250, %v495
  %v497 = vpop.f32.mrf.mxu0
  %v498 = vadd.f32 %v252, %v497
  %499 = vmatmul.bf16.gmra.mxu0 %v432
  %v500 = vpop.f32.mrf.mxu0
  %v501 = vadd.f32 %v255, %v500
  %v502 = vpop.f32.mrf.mxu0
  %v503 = vadd.f32 %v257, %v502
  %504 = vmatmul.bf16.gmra.mxu0 %v435
  %v505 = vpop.f32.mrf.mxu0
  %v506 = vadd.f32 %v260, %v505
  %v507 = vpop.f32.mrf.mxu0
  %v508 = vadd.f32 %v262, %v507
  %509 = vmatmul.bf16.gmra.mxu0 %v438
  %v510 = vpop.f32.mrf.mxu0
  %v511 = vadd.f32 %v265, %v510
  %v512 = vpop.f32.mrf.mxu0
  %v513 = vadd.f32 %v267, %v512
  %514 = vmatmul.bf16.gmra.mxu0 %v441
  %v515 = vpop.f32.mrf.mxu0
  %v516 = vadd.f32 %v270, %v515
  %v517 = vpop.f32.mrf.mxu0
  %v518 = vadd.f32 %v272, %v517
  %519 = vmatmul.bf16.gmra.mxu0 %v444
  %v520 = vpop.f32.mrf.mxu0
  %v521 = vadd.f32 %v275, %v520
  %v522 = vpop.f32.mrf.mxu0
  %v523 = vadd.f32 %v277, %v522
  %524 = vmatmul.bf16.gmra.mxu0 %v447
  %v525 = vpop.f32.mrf.mxu0
  %v526 = vadd.f32 %v280, %v525
  %v527 = vpop.f32.mrf.mxu0
  %v528 = vadd.f32 %v282, %v527
  %529 = vmatmul.bf16.gmra.mxu0 %v450
  %v530 = vpop.f32.mrf.mxu0
  %v531 = vadd.f32 %v285, %v530
  %v532 = vpop.f32.mrf.mxu0
  %v533 = vadd.f32 %v287, %v532
  %534 = vmatmul.bf16.gmra.mxu0 %v453
  %v535 = vpop.f32.mrf.mxu0
  %v536 = vadd.f32 %v290, %v535
  %v537 = vpop.f32.mrf.mxu0
  %v538 = vadd.f32 %v292, %v537
  %539 = vmatmul.bf16.gmra.mxu0 %v456
  %v540 = vpop.f32.mrf.mxu0
  %v541 = vadd.f32 %v295, %v540
  %v542 = vpop.f32.mrf.mxu0
  %v543 = vadd.f32 %v297, %v542
  %544 = vmatmul.bf16.gmra.mxu0 %v459
  %v545 = vpop.f32.mrf.mxu0
  %v546 = vadd.f32 %v300, %v545
  %v547 = vpop.f32.mrf.mxu0
  %v548 = vadd.f32 %v302, %v547
  %549 = vdwg.mxu0
  %550 = vmatpush.bf16.msra.mxu0 0
  %551 = vmatpush.bf16.msra.mxu0 0
  %552 = vmatpush.bf16.msra.mxu0 0
  %553 = vmatpush.bf16.msra.mxu0 0
  %554 = vmatpush.bf16.msra.mxu0 0
  %555 = vmatpush.bf16.msra.mxu0 0
  %556 = vmatpush.bf16.msra.mxu0 %v408
  %557 = vmatpush.bf16.msra.mxu0 %v406
  %558 = vmatmul.bf16.gmra.mxu0 %v414
  %v559 = vpop.f32.mrf.mxu0
  %v560 = vadd.f32 %v314, %v559
  %v561 = vpop.f32.mrf.mxu0
  %v562 = vadd.f32 %v316, %v561
  %563 = vmatmul.bf16.gmra.mxu0 %v417
  %v564 = vpop.f32.mrf.mxu0
  %v565 = vadd.f32 %v319, %v564
  %v566 = vpop.f32.mrf.mxu0
  %v567 = vadd.f32 %v321, %v566
  %568 = vmatmul.bf16.gmra.mxu0 %v420
  %v569 = vpop.f32.mrf.mxu0
  %v570 = vadd.f32 %v324, %v569
  %v571 = vpop.f32.mrf.mxu0
  %v572 = vadd.f32 %v326, %v571
  %573 = vmatmul.bf16.gmra.mxu0 %v423
  %v574 = vpop.f32.mrf.mxu0
  %v575 = vadd.f32 %v329, %v574
  %v576 = vpop.f32.mrf.mxu0
  %v577 = vadd.f32 %v331, %v576
  %578 = vmatmul.bf16.gmra.mxu0 %v426
  %v579 = vpop.f32.mrf.mxu0
  %v580 = vadd.f32 %v334, %v579
  %v581 = vpop.f32.mrf.mxu0
  %v582 = vadd.f32 %v336, %v581
  %583 = vmatmul.bf16.gmra.mxu0 %v429
  %v584 = vpop.f32.mrf.mxu0
  %v585 = vadd.f32 %v339, %v584
  %v586 = vpop.f32.mrf.mxu0
  %v587 = vadd.f32 %v341, %v586
  %588 = vmatmul.bf16.gmra.mxu0 %v432
  %v589 = vpop.f32.mrf.mxu0
  %v590 = vadd.f32 %v344, %v589
  %v591 = vpop.f32.mrf.mxu0
  %v592 = vadd.f32 %v346, %v591
  %593 = vmatmul.bf16.gmra.mxu0 %v435
  %v594 = vpop.f32.mrf.mxu0
  %v595 = vadd.f32 %v349, %v594
  %v596 = vpop.f32.mrf.mxu0
  %v597 = vadd.f32 %v351, %v596
  %598 = vmatmul.bf16.gmra.mxu0 %v438
  %v599 = vpop.f32.mrf.mxu0
  %v600 = vadd.f32 %v354, %v599
  %v601 = vpop.f32.mrf.mxu0
  %v602 = vadd.f32 %v356, %v601
  %603 = vmatmul.bf16.gmra.mxu0 %v441
  %v604 = vpop.f32.mrf.mxu0
  %v605 = vadd.f32 %v359, %v604
  %v606 = vpop.f32.mrf.mxu0
  %v607 = vadd.f32 %v361, %v606
  %608 = vmatmul.bf16.gmra.mxu0 %v444
  %v609 = vpop.f32.mrf.mxu0
  %v610 = vadd.f32 %v364, %v609
  %v611 = vpop.f32.mrf.mxu0
  %v612 = vadd.f32 %v366, %v611
  %613 = vmatmul.bf16.gmra.mxu0 %v447
  %v614 = vpop.f32.mrf.mxu0
  %v615 = vadd.f32 %v369, %v614
  %v616 = vpop.f32.mrf.mxu0
  %v617 = vadd.f32 %v371, %v616
  %618 = vmatmul.bf16.gmra.mxu0 %v450
  %v619 = vpop.f32.mrf.mxu0
  %v620 = vadd.f32 %v374, %v619
  %v621 = vpop.f32.mrf.mxu0
  %v622 = vadd.f32 %v376, %v621
  %623 = vmatmul.bf16.gmra.mxu0 %v453
  %v624 = vpop.f32.mrf.mxu0
  %v625 = vadd.f32 %v379, %v624
  %v626 = vpop.f32.mrf.mxu0
  %v627 = vadd.f32 %v381, %v626
  %628 = vmatmul.bf16.gmra.mxu0 %v456
  %v629 = vpop.f32.mrf.mxu0
  %v630 = vadd.f32 %v384, %v629
  %v631 = vpop.f32.mrf.mxu0
  %v632 = vadd.f32 %v386, %v631
  %633 = vmatmul.bf16.gmra.mxu0 %v459
  %v634 = vpop.f32.mrf.mxu0
  %v635 = vadd.f32 %v389, %v634
  %v636 = vpop.f32.mrf.mxu0
  %v637 = vadd.f32 %v391, %v636
  %638 = vdwg.mxu0
  %v639 = vld [vmem:[%s4] sm:$0x3]
  %v641 = vperm.slane %v639, 0
  %v642 = vperm.slane %v639, 1
  %v645 = vadd.f32 %v471, %v641
  %v646 = vadd.f32 %v560, %v642
  %v647 = vadd.f32 %v473, %v641
  %v648 = vadd.f32 %v562, %v642
  %v649 = vadd.f32 %v476, %v641
  %v650 = vadd.f32 %v565, %v642
  %v651 = vadd.f32 %v478, %v641
  %v652 = vadd.f32 %v567, %v642
  %v653 = vadd.f32 %v481, %v641
  %v654 = vadd.f32 %v570, %v642
  %v655 = vadd.f32 %v483, %v641
  %v656 = vadd.f32 %v572, %v642
  %v657 = vadd.f32 %v486, %v641
  %v658 = vadd.f32 %v575, %v642
  %v659 = vadd.f32 %v488, %v641
  %v660 = vadd.f32 %v577, %v642
  %v661 = vadd.f32 %v491, %v641
  %v662 = vadd.f32 %v580, %v642
  %v663 = vadd.f32 %v493, %v641
  %v664 = vadd.f32 %v582, %v642
  %v665 = vadd.f32 %v496, %v641
  %v666 = vadd.f32 %v585, %v642
  %v667 = vadd.f32 %v498, %v641
  %v668 = vadd.f32 %v587, %v642
  %v669 = vadd.f32 %v501, %v641
  %v670 = vadd.f32 %v590, %v642
  %v671 = vadd.f32 %v503, %v641
  %v672 = vadd.f32 %v592, %v642
  %v673 = vadd.f32 %v506, %v641
  %v674 = vadd.f32 %v595, %v642
  %v675 = vadd.f32 %v508, %v641
  %v676 = vadd.f32 %v597, %v642
  %v677 = vadd.f32 %v511, %v641
  %v678 = vadd.f32 %v600, %v642
  %v679 = vadd.f32 %v513, %v641
  %v680 = vadd.f32 %v602, %v642
  %v681 = vadd.f32 %v516, %v641
  %v682 = vadd.f32 %v605, %v642
  %v683 = vadd.f32 %v518, %v641
  %v684 = vadd.f32 %v607, %v642
  %v685 = vadd.f32 %v521, %v641
  %v686 = vadd.f32 %v610, %v642
  %v687 = vadd.f32 %v523, %v641
  %v688 = vadd.f32 %v612, %v642
  %v689 = vadd.f32 %v526, %v641
  %v690 = vadd.f32 %v615, %v642
  %v691 = vadd.f32 %v528, %v641
  %v692 = vadd.f32 %v617, %v642
  %v693 = vadd.f32 %v531, %v641
  %v694 = vadd.f32 %v620, %v642
  %v695 = vadd.f32 %v533, %v641
  %v696 = vadd.f32 %v622, %v642
  %v697 = vadd.f32 %v536, %v641
  %v698 = vadd.f32 %v625, %v642
  %v699 = vadd.f32 %v538, %v641
  %v700 = vadd.f32 %v627, %v642
  %v701 = vadd.f32 %v541, %v641
  %v702 = vadd.f32 %v630, %v642
  %v703 = vadd.f32 %v543, %v641
  %v704 = vadd.f32 %v632, %v642
  %v705 = vadd.f32 %v546, %v641
  %v706 = vadd.f32 %v635, %v642
  %v707 = vadd.f32 %v548, %v641
  %v708 = vadd.f32 %v637, %v642
  %v709 = vmax.f32 %v645, 0.0
  %v710 = vmax.f32 %v646, 0.0
  %v711 = vmax.f32 %v647, 0.0
  %v712 = vmax.f32 %v648, 0.0
  %v713 = vmax.f32 %v649, 0.0
  %v714 = vmax.f32 %v650, 0.0
  %v715 = vmax.f32 %v651, 0.0
  %v716 = vmax.f32 %v652, 0.0
  %v717 = vmax.f32 %v653, 0.0
  %v718 = vmax.f32 %v654, 0.0
  %v719 = vmax.f32 %v655, 0.0
  %v720 = vmax.f32 %v656, 0.0
  %v721 = vmax.f32 %v657, 0.0
  %v722 = vmax.f32 %v658, 0.0
  %v723 = vmax.f32 %v659, 0.0
  %v724 = vmax.f32 %v660, 0.0
  %v725 = vmax.f32 %v661, 0.0
  %v726 = vmax.f32 %v662, 0.0
  %v727 = vmax.f32 %v663, 0.0
  %v728 = vmax.f32 %v664, 0.0
  %v729 = vmax.f32 %v665, 0.0
  %v730 = vmax.f32 %v666, 0.0
  %v731 = vmax.f32 %v667, 0.0
  %v732 = vmax.f32 %v668, 0.0
  %v733 = vmax.f32 %v669, 0.0
  %v734 = vmax.f32 %v670, 0.0
  %v735 = vmax.f32 %v671, 0.0
  %v736 = vmax.f32 %v672, 0.0
  %v737 = vmax.f32 %v673, 0.0
  %v738 = vmax.f32 %v674, 0.0
  %v739 = vmax.f32 %v675, 0.0
  %v740 = vmax.f32 %v676, 0.0
  %v741 = vmax.f32 %v677, 0.0
  %v742 = vmax.f32 %v678, 0.0
  %v743 = vmax.f32 %v679, 0.0
  %v744 = vmax.f32 %v680, 0.0
  %v745 = vmax.f32 %v681, 0.0
  %v746 = vmax.f32 %v682, 0.0
  %v747 = vmax.f32 %v683, 0.0
  %v748 = vmax.f32 %v684, 0.0
  %v749 = vmax.f32 %v685, 0.0
  %v750 = vmax.f32 %v686, 0.0
  %v751 = vmax.f32 %v687, 0.0
  %v752 = vmax.f32 %v688, 0.0
  %v753 = vmax.f32 %v689, 0.0
  %v754 = vmax.f32 %v690, 0.0
  %v755 = vmax.f32 %v691, 0.0
  %v756 = vmax.f32 %v692, 0.0
  %v757 = vmax.f32 %v693, 0.0
  %v758 = vmax.f32 %v694, 0.0
  %v759 = vmax.f32 %v695, 0.0
  %v760 = vmax.f32 %v696, 0.0
  %v761 = vmax.f32 %v697, 0.0
  %v762 = vmax.f32 %v698, 0.0
  %v763 = vmax.f32 %v699, 0.0
  %v764 = vmax.f32 %v700, 0.0
  %v765 = vmax.f32 %v701, 0.0
  %v766 = vmax.f32 %v702, 0.0
  %v767 = vmax.f32 %v703, 0.0
  %v768 = vmax.f32 %v704, 0.0
  %v769 = vmax.f32 %v705, 0.0
  %v770 = vmax.f32 %v706, 0.0
  %v771 = vmax.f32 %v707, 0.0
  %v772 = vmax.f32 %v708, 0.0
  %v773 = vpack.c.bf16 %v711, %v709
  %v774 = vpack.c.bf16 %v712, %v710
  %v775 = vpack.c.bf16 %v715, %v713
  %v776 = vpack.c.bf16 %v716, %v714
  %v777 = vpack.c.bf16 %v719, %v717
  %v778 = vpack.c.bf16 %v720, %v718
  %v779 = vpack.c.bf16 %v723, %v721
  %v780 = vpack.c.bf16 %v724, %v722
  %v781 = vpack.c.bf16 %v727, %v725
  %v782 = vpack.c.bf16 %v728, %v726
  %v783 = vpack.c.bf16 %v731, %v729
  %v784 = vpack.c.bf16 %v732, %v730
  %v785 = vpack.c.bf16 %v735, %v733
  %v786 = vpack.c.bf16 %v736, %v734
  %v787 = vpack.c.bf16 %v739, %v737
  %v788 = vpack.c.bf16 %v740, %v738
  %v789 = vpack.c.bf16 %v743, %v741
  %v790 = vpack.c.bf16 %v744, %v742
  %v791 = vpack.c.bf16 %v747, %v745
  %v792 = vpack.c.bf16 %v748, %v746
  %v793 = vpack.c.bf16 %v751, %v749
  %v794 = vpack.c.bf16 %v752, %v750
  %v795 = vpack.c.bf16 %v755, %v753
  %v796 = vpack.c.bf16 %v756, %v754
  %v797 = vpack.c.bf16 %v759, %v757
  %v798 = vpack.c.bf16 %v760, %v758
  %v799 = vpack.c.bf16 %v763, %v761
  %v800 = vpack.c.bf16 %v764, %v762
  %v801 = vpack.c.bf16 %v767, %v765
  %v802 = vpack.c.bf16 %v768, %v766
  %v803 = vpack.c.bf16 %v771, %v769
  %v804 = vpack.c.bf16 %v772, %v770
  %v805 = vld [vmem:[%s5] sm:$0xf]
  %v806 = vld [vmem:[%s5 + $0x4] sm:$0xf]
  %v807 = vld [vmem:[%s5 + $0x8] sm:$0xf]
  %v808 = vld [vmem:[%s5 + $0xc] sm:$0xf]
  %v809 = vld [vmem:[%s5 + $0x10] sm:$0xf]
  %v810 = vld [vmem:[%s5 + $0x14] sm:$0xf]
  %v811 = vld [vmem:[%s5 + $0x18] sm:$0xf]
  %v812 = vld [vmem:[%s5 + $0x1c] sm:$0xf]
  %v813 = vld [vmem:[%s5 + $0x20] sm:$0xf]
  %v814 = vld [vmem:[%s5 + $0x24] sm:$0xf]
  %v815 = vld [vmem:[%s5 + $0x28] sm:$0xf]
  %v816 = vld [vmem:[%s5 + $0x2c] sm:$0xf]
  %v817 = vld [vmem:[%s5 + $0x30] sm:$0xf]
  %v818 = vld [vmem:[%s5 + $0x34] sm:$0xf]
  %v819 = vld [vmem:[%s5 + $0x38] sm:$0xf]
  %v820 = vld [vmem:[%s5 + $0x3c] sm:$0xf]
  %v821 = vld [vmem:[%s5 + $0x40] sm:$0xf]
  %v822 = vld [vmem:[%s5 + $0x44] sm:$0xf]
  %v823 = vld [vmem:[%s5 + $0x48] sm:$0xf]
  %v824 = vld [vmem:[%s5 + $0x4c] sm:$0xf]
  %v825 = vld [vmem:[%s5 + $0x50] sm:$0xf]
  %v826 = vld [vmem:[%s5 + $0x54] sm:$0xf]
  %v827 = vld [vmem:[%s5 + $0x58] sm:$0xf]
  %v828 = vld [vmem:[%s5 + $0x5c] sm:$0xf]
  %v829 = vld [vmem:[%s5 + $0x60] sm:$0xf]
  %v830 = vld [vmem:[%s5 + $0x64] sm:$0xf]
  %v831 = vld [vmem:[%s5 + $0x68] sm:$0xf]
  %v832 = vld [vmem:[%s5 + $0x6c] sm:$0xf]
  %v833 = vld [vmem:[%s5 + $0x70] sm:$0xf]
  %v834 = vld [vmem:[%s5 + $0x74] sm:$0xf]
  %v835 = vld [vmem:[%s5 + $0x78] sm:$0xf]
  %v836 = vld [vmem:[%s5 + $0x7c] sm:$0xf]
  %v837 = vld [vmem:[%s7] sm:$0x1]
  %v839 = vperm.slane %v837, 0
  %v873 = vunpack.c.l.b16 %v805
  %v874 = vunpack.c.l.b16 %v806
  %v875 = vunpack.c.l.b16 %v807
  %v876 = vunpack.c.l.b16 %v808
  %v877 = vunpack.c.l.b16 %v809
  %v878 = vunpack.c.l.b16 %v810
  %v879 = vunpack.c.l.b16 %v811
  %v880 = vunpack.c.l.b16 %v812
  %v881 = vunpack.c.l.b16 %v813
  %v882 = vunpack.c.l.b16 %v814
  %v883 = vunpack.c.l.b16 %v815
  %v884 = vunpack.c.l.b16 %v816
  %v885 = vunpack.c.l.b16 %v817
  %v886 = vunpack.c.l.b16 %v818
  %v887 = vunpack.c.l.b16 %v819
  %v888 = vunpack.c.l.b16 %v820
  %v889 = vunpack.c.l.b16 %v821
  %v890 = vunpack.c.l.b16 %v822
  %v891 = vunpack.c.l.b16 %v823
  %v892 = vunpack.c.l.b16 %v824
  %v893 = vunpack.c.l.b16 %v825
  %v894 = vunpack.c.l.b16 %v826
  %v895 = vunpack.c.l.b16 %v827
  %v896 = vunpack.c.l.b16 %v828
  %v897 = vunpack.c.l.b16 %v829
  %v898 = vunpack.c.l.b16 %v830
  %v899 = vunpack.c.l.b16 %v831
  %v900 = vunpack.c.l.b16 %v832
  %v901 = vunpack.c.l.b16 %v833
  %v902 = vunpack.c.l.b16 %v834
  %v903 = vunpack.c.l.b16 %v835
  %v904 = vunpack.c.l.b16 %v836
  %v905 = vpack.c.b16 %v874, %v873
  %v906 = vpack.c.b16 %v876, %v875
  %v907 = vpack.c.b16 %v878, %v877
  %v908 = vpack.c.b16 %v880, %v879
  %v909 = vpack.c.b16 %v882, %v881
  %v910 = vpack.c.b16 %v884, %v883
  %v911 = vpack.c.b16 %v886, %v885
  %v912 = vpack.c.b16 %v888, %v887
  %v913 = vpack.c.b16 %v890, %v889
  %v914 = vpack.c.b16 %v892, %v891
  %v915 = vpack.c.b16 %v894, %v893
  %v916 = vpack.c.b16 %v896, %v895
  %v917 = vpack.c.b16 %v898, %v897
  %v918 = vpack.c.b16 %v900, %v899
  %v919 = vpack.c.b16 %v902, %v901
  %v920 = vpack.c.b16 %v904, %v903
  %937 = vmatpush.bf16.msra.mxu0 %v912
  %938 = vmatpush.bf16.msra.mxu0 %v911
  %939 = vmatpush.bf16.msra.mxu0 %v910
  %940 = vmatpush.bf16.msra.mxu0 %v909
  %941 = vmatpush.bf16.msra.mxu0 %v908
  %942 = vmatpush.bf16.msra.mxu0 %v907
  %943 = vmatpush.bf16.msra.mxu0 %v906
  %944 = vmatpush.bf16.msra.mxu0 %v905
  %945 = vmatmul.bf16.gmra.mxu0 %v773
  %v946 = vpop.f32.mrf.mxu0
  %v947 = vadd.f32 %v839, %v946
  %v948 = vpop.f32.mrf.mxu0
  %v949 = vadd.f32 %v839, %v948
  %950 = vmatmul.bf16.gmra.mxu0 %v775
  %v951 = vpop.f32.mrf.mxu0
  %v952 = vadd.f32 %v839, %v951
  %v953 = vpop.f32.mrf.mxu0
  %v954 = vadd.f32 %v839, %v953
  %955 = vmatmul.bf16.gmra.mxu0 %v777
  %v956 = vpop.f32.mrf.mxu0
  %v957 = vadd.f32 %v839, %v956
  %v958 = vpop.f32.mrf.mxu0
  %v959 = vadd.f32 %v839, %v958
  %960 = vmatmul.bf16.gmra.mxu0 %v779
  %v961 = vpop.f32.mrf.mxu0
  %v962 = vadd.f32 %v839, %v961
  %v963 = vpop.f32.mrf.mxu0
  %v964 = vadd.f32 %v839, %v963
  %965 = vmatmul.bf16.gmra.mxu0 %v781
  %v966 = vpop.f32.mrf.mxu0
  %v967 = vadd.f32 %v839, %v966
  %v968 = vpop.f32.mrf.mxu0
  %v969 = vadd.f32 %v839, %v968
  %970 = vmatmul.bf16.gmra.mxu0 %v783
  %v971 = vpop.f32.mrf.mxu0
  %v972 = vadd.f32 %v839, %v971
  %v973 = vpop.f32.mrf.mxu0
  %v974 = vadd.f32 %v839, %v973
  %975 = vmatmul.bf16.gmra.mxu0 %v785
  %v976 = vpop.f32.mrf.mxu0
  %v977 = vadd.f32 %v839, %v976
  %v978 = vpop.f32.mrf.mxu0
  %v979 = vadd.f32 %v839, %v978
  %980 = vmatmul.bf16.gmra.mxu0 %v787
  %v981 = vpop.f32.mrf.mxu0
  %v982 = vadd.f32 %v839, %v981
  %v983 = vpop.f32.mrf.mxu0
  %v984 = vadd.f32 %v839, %v983
  %985 = vmatmul.bf16.gmra.mxu0 %v789
  %v986 = vpop.f32.mrf.mxu0
  %v987 = vadd.f32 %v839, %v986
  %v988 = vpop.f32.mrf.mxu0
  %v989 = vadd.f32 %v839, %v988
  %990 = vmatmul.bf16.gmra.mxu0 %v791
  %v991 = vpop.f32.mrf.mxu0
  %v992 = vadd.f32 %v839, %v991
  %v993 = vpop.f32.mrf.mxu0
  %v994 = vadd.f32 %v839, %v993
  %995 = vmatmul.bf16.gmra.mxu0 %v793
  %v996 = vpop.f32.mrf.mxu0
  %v997 = vadd.f32 %v839, %v996
  %v998 = vpop.f32.mrf.mxu0
  %v999 = vadd.f32 %v839, %v998
  %1000 = vmatmul.bf16.gmra.mxu0 %v795
  %v1001 = vpop.f32.mrf.mxu0
  %v1002 = vadd.f32 %v839, %v1001
  %v1003 = vpop.f32.mrf.mxu0
  %v1004 = vadd.f32 %v839, %v1003
  %1005 = vmatmul.bf16.gmra.mxu0 %v797
  %v1006 = vpop.f32.mrf.mxu0
  %v1007 = vadd.f32 %v839, %v1006
  %v1008 = vpop.f32.mrf.mxu0
  %v1009 = vadd.f32 %v839, %v1008
  %1010 = vmatmul.bf16.gmra.mxu0 %v799
  %v1011 = vpop.f32.mrf.mxu0
  %v1012 = vadd.f32 %v839, %v1011
  %v1013 = vpop.f32.mrf.mxu0
  %v1014 = vadd.f32 %v839, %v1013
  %1015 = vmatmul.bf16.gmra.mxu0 %v801
  %v1016 = vpop.f32.mrf.mxu0
  %v1017 = vadd.f32 %v839, %v1016
  %v1018 = vpop.f32.mrf.mxu0
  %v1019 = vadd.f32 %v839, %v1018
  %1020 = vmatmul.bf16.gmra.mxu0 %v803
  %v1021 = vpop.f32.mrf.mxu0
  %v1022 = vadd.f32 %v839, %v1021
  %v1023 = vpop.f32.mrf.mxu0
  %v1024 = vadd.f32 %v839, %v1023
  %1025 = vdwg.mxu0
  %1026 = vmatpush.bf16.msra.mxu0 %v920
  %1027 = vmatpush.bf16.msra.mxu0 %v919
  %1028 = vmatpush.bf16.msra.mxu0 %v918
  %1029 = vmatpush.bf16.msra.mxu0 %v917
  %1030 = vmatpush.bf16.msra.mxu0 %v916
  %1031 = vmatpush.bf16.msra.mxu0 %v915
  %1032 = vmatpush.bf16.msra.mxu0 %v914
  %1033 = vmatpush.bf16.msra.mxu0 %v913
  %1034 = vmatmul.bf16.gmra.mxu0 %v774
  %v1035 = vpop.f32.mrf.mxu0
  %v1036 = vadd.f32 %v947, %v1035
  %v1037 = vpop.f32.mrf.mxu0
  %v1038 = vadd.f32 %v949, %v1037
  %1039 = vmatmul.bf16.gmra.mxu0 %v776
  %v1040 = vpop.f32.mrf.mxu0
  %v1041 = vadd.f32 %v952, %v1040
  %v1042 = vpop.f32.mrf.mxu0
  %v1043 = vadd.f32 %v954, %v1042
  %1044 = vmatmul.bf16.gmra.mxu0 %v778
  %v1045 = vpop.f32.mrf.mxu0
  %v1046 = vadd.f32 %v957, %v1045
  %v1047 = vpop.f32.mrf.mxu0
  %v1048 = vadd.f32 %v959, %v1047
  %1049 = vmatmul.bf16.gmra.mxu0 %v780
  %v1050 = vpop.f32.mrf.mxu0
  %v1051 = vadd.f32 %v962, %v1050
  %v1052 = vpop.f32.mrf.mxu0
  %v1053 = vadd.f32 %v964, %v1052
  %1054 = vmatmul.bf16.gmra.mxu0 %v782
  %v1055 = vpop.f32.mrf.mxu0
  %v1056 = vadd.f32 %v967, %v1055
  %v1057 = vpop.f32.mrf.mxu0
  %v1058 = vadd.f32 %v969, %v1057
  %1059 = vmatmul.bf16.gmra.mxu0 %v784
  %v1060 = vpop.f32.mrf.mxu0
  %v1061 = vadd.f32 %v972, %v1060
  %v1062 = vpop.f32.mrf.mxu0
  %v1063 = vadd.f32 %v974, %v1062
  %1064 = vmatmul.bf16.gmra.mxu0 %v786
  %v1065 = vpop.f32.mrf.mxu0
  %v1066 = vadd.f32 %v977, %v1065
  %v1067 = vpop.f32.mrf.mxu0
  %v1068 = vadd.f32 %v979, %v1067
  %1069 = vmatmul.bf16.gmra.mxu0 %v788
  %v1070 = vpop.f32.mrf.mxu0
  %v1071 = vadd.f32 %v982, %v1070
  %v1072 = vpop.f32.mrf.mxu0
  %v1073 = vadd.f32 %v984, %v1072
  %1074 = vmatmul.bf16.gmra.mxu0 %v790
  %v1075 = vpop.f32.mrf.mxu0
  %v1076 = vadd.f32 %v987, %v1075
  %v1077 = vpop.f32.mrf.mxu0
  %v1078 = vadd.f32 %v989, %v1077
  %1079 = vmatmul.bf16.gmra.mxu0 %v792
  %v1080 = vpop.f32.mrf.mxu0
  %v1081 = vadd.f32 %v992, %v1080
  %v1082 = vpop.f32.mrf.mxu0
  %v1083 = vadd.f32 %v994, %v1082
  %1084 = vmatmul.bf16.gmra.mxu0 %v794
  %v1085 = vpop.f32.mrf.mxu0
  %v1086 = vadd.f32 %v997, %v1085
  %v1087 = vpop.f32.mrf.mxu0
  %v1088 = vadd.f32 %v999, %v1087
  %1089 = vmatmul.bf16.gmra.mxu0 %v796
  %v1090 = vpop.f32.mrf.mxu0
  %v1091 = vadd.f32 %v1002, %v1090
  %v1092 = vpop.f32.mrf.mxu0
  %v1093 = vadd.f32 %v1004, %v1092
  %1094 = vmatmul.bf16.gmra.mxu0 %v798
  %v1095 = vpop.f32.mrf.mxu0
  %v1096 = vadd.f32 %v1007, %v1095
  %v1097 = vpop.f32.mrf.mxu0
  %v1098 = vadd.f32 %v1009, %v1097
  %1099 = vmatmul.bf16.gmra.mxu0 %v800
  %v1100 = vpop.f32.mrf.mxu0
  %v1101 = vadd.f32 %v1012, %v1100
  %v1102 = vpop.f32.mrf.mxu0
  %v1103 = vadd.f32 %v1014, %v1102
  %1104 = vmatmul.bf16.gmra.mxu0 %v802
  %v1105 = vpop.f32.mrf.mxu0
  %v1106 = vadd.f32 %v1017, %v1105
  %v1107 = vpop.f32.mrf.mxu0
  %v1108 = vadd.f32 %v1019, %v1107
  %1109 = vmatmul.bf16.gmra.mxu0 %v804
  %v1110 = vpop.f32.mrf.mxu0
  %v1111 = vadd.f32 %v1022, %v1110
  %v1112 = vpop.f32.mrf.mxu0
  %v1113 = vadd.f32 %v1024, %v1112
  %1114 = vdwg.mxu0
  %v1115 = vadd.f32 %v1036, %v42
  %v1116 = vadd.f32 %v1038, %v43
  %v1117 = vadd.f32 %v1041, %v44
  %v1118 = vadd.f32 %v1043, %v45
  %v1119 = vadd.f32 %v1046, %v46
  %v1120 = vadd.f32 %v1048, %v47
  %v1121 = vadd.f32 %v1051, %v48
  %v1122 = vadd.f32 %v1053, %v49
  %v1123 = vadd.f32 %v1056, %v50
  %v1124 = vadd.f32 %v1058, %v51
  %v1125 = vadd.f32 %v1061, %v52
  %v1126 = vadd.f32 %v1063, %v53
  %v1127 = vadd.f32 %v1066, %v54
  %v1128 = vadd.f32 %v1068, %v55
  %v1129 = vadd.f32 %v1071, %v56
  %v1130 = vadd.f32 %v1073, %v57
  %v1131 = vadd.f32 %v1076, %v58
  %v1132 = vadd.f32 %v1078, %v59
  %v1133 = vadd.f32 %v1081, %v60
  %v1134 = vadd.f32 %v1083, %v61
  %v1135 = vadd.f32 %v1086, %v62
  %v1136 = vadd.f32 %v1088, %v63
  %v1137 = vadd.f32 %v1091, %v64
  %v1138 = vadd.f32 %v1093, %v65
  %v1139 = vadd.f32 %v1096, %v66
  %v1140 = vadd.f32 %v1098, %v67
  %v1141 = vadd.f32 %v1101, %v68
  %v1142 = vadd.f32 %v1103, %v69
  %v1143 = vadd.f32 %v1106, %v70
  %v1144 = vadd.f32 %v1108, %v71
  %v1145 = vadd.f32 %v1111, %v72
  %v1146 = vadd.f32 %v1113, %v73
  %v1147 = vld [vmem:[%s6] sm:$0xf]
  %v1148 = vld [vmem:[%s6 + $0x4] sm:$0xf]
  %v1149 = vld [vmem:[%s6 + $0x8] sm:$0xf]
  %v1150 = vld [vmem:[%s6 + $0xc] sm:$0xf]
  %v1151 = vld [vmem:[%s6 + $0x10] sm:$0xf]
  %v1152 = vld [vmem:[%s6 + $0x14] sm:$0xf]
  %v1153 = vld [vmem:[%s6 + $0x18] sm:$0xf]
  %v1154 = vld [vmem:[%s6 + $0x1c] sm:$0xf]
  %v1155 = vld [vmem:[%s6 + $0x20] sm:$0xf]
  %v1156 = vld [vmem:[%s6 + $0x24] sm:$0xf]
  %v1157 = vld [vmem:[%s6 + $0x28] sm:$0xf]
  %v1158 = vld [vmem:[%s6 + $0x2c] sm:$0xf]
  %v1159 = vld [vmem:[%s6 + $0x30] sm:$0xf]
  %v1160 = vld [vmem:[%s6 + $0x34] sm:$0xf]
  %v1161 = vld [vmem:[%s6 + $0x38] sm:$0xf]
  %v1162 = vld [vmem:[%s6 + $0x3c] sm:$0xf]
  %v1163 = vld [vmem:[%s6 + $0x40] sm:$0xf]
  %v1164 = vld [vmem:[%s6 + $0x44] sm:$0xf]
  %v1165 = vld [vmem:[%s6 + $0x48] sm:$0xf]
  %v1166 = vld [vmem:[%s6 + $0x4c] sm:$0xf]
  %v1167 = vld [vmem:[%s6 + $0x50] sm:$0xf]
  %v1168 = vld [vmem:[%s6 + $0x54] sm:$0xf]
  %v1169 = vld [vmem:[%s6 + $0x58] sm:$0xf]
  %v1170 = vld [vmem:[%s6 + $0x5c] sm:$0xf]
  %v1171 = vld [vmem:[%s6 + $0x60] sm:$0xf]
  %v1172 = vld [vmem:[%s6 + $0x64] sm:$0xf]
  %v1173 = vld [vmem:[%s6 + $0x68] sm:$0xf]
  %v1174 = vld [vmem:[%s6 + $0x6c] sm:$0xf]
  %v1175 = vld [vmem:[%s6 + $0x70] sm:$0xf]
  %v1176 = vld [vmem:[%s6 + $0x74] sm:$0xf]
  %v1177 = vld [vmem:[%s6 + $0x78] sm:$0xf]
  %v1178 = vld [vmem:[%s6 + $0x7c] sm:$0xf]
  %v1179 = vld [vmem:[%s8] sm:$0x1]
  %v1181 = vperm.slane %v1179, 0
  %v1215 = vunpack.c.l.b16 %v1147
  %v1216 = vunpack.c.l.b16 %v1148
  %v1217 = vunpack.c.l.b16 %v1149
  %v1218 = vunpack.c.l.b16 %v1150
  %v1219 = vunpack.c.l.b16 %v1151
  %v1220 = vunpack.c.l.b16 %v1152
  %v1221 = vunpack.c.l.b16 %v1153
  %v1222 = vunpack.c.l.b16 %v1154
  %v1223 = vunpack.c.l.b16 %v1155
  %v1224 = vunpack.c.l.b16 %v1156
  %v1225 = vunpack.c.l.b16 %v1157
  %v1226 = vunpack.c.l.b16 %v1158
  %v1227 = vunpack.c.l.b16 %v1159
  %v1228 = vunpack.c.l.b16 %v1160
  %v1229 = vunpack.c.l.b16 %v1161
  %v1230 = vunpack.c.l.b16 %v1162
  %v1231 = vunpack.c.l.b16 %v1163
  %v1232 = vunpack.c.l.b16 %v1164
  %v1233 = vunpack.c.l.b16 %v1165
  %v1234 = vunpack.c.l.b16 %v1166
  %v1235 = vunpack.c.l.b16 %v1167
  %v1236 = vunpack.c.l.b16 %v1168
  %v1237 = vunpack.c.l.b16 %v1169
  %v1238 = vunpack.c.l.b16 %v1170
  %v1239 = vunpack.c.l.b16 %v1171
  %v1240 = vunpack.c.l.b16 %v1172
  %v1241 = vunpack.c.l.b16 %v1173
  %v1242 = vunpack.c.l.b16 %v1174
  %v1243 = vunpack.c.l.b16 %v1175
  %v1244 = vunpack.c.l.b16 %v1176
  %v1245 = vunpack.c.l.b16 %v1177
  %v1246 = vunpack.c.l.b16 %v1178
  %v1247 = vpack.c.b16 %v1216, %v1215
  %v1248 = vpack.c.b16 %v1218, %v1217
  %v1249 = vpack.c.b16 %v1220, %v1219
  %v1250 = vpack.c.b16 %v1222, %v1221
  %v1251 = vpack.c.b16 %v1224, %v1223
  %v1252 = vpack.c.b16 %v1226, %v1225
  %v1253 = vpack.c.b16 %v1228, %v1227
  %v1254 = vpack.c.b16 %v1230, %v1229
  %v1255 = vpack.c.b16 %v1232, %v1231
  %v1256 = vpack.c.b16 %v1234, %v1233
  %v1257 = vpack.c.b16 %v1236, %v1235
  %v1258 = vpack.c.b16 %v1238, %v1237
  %v1259 = vpack.c.b16 %v1240, %v1239
  %v1260 = vpack.c.b16 %v1242, %v1241
  %v1261 = vpack.c.b16 %v1244, %v1243
  %v1262 = vpack.c.b16 %v1246, %v1245
  %1279 = vmatpush.bf16.msra.mxu0 %v1254
  %1280 = vmatpush.bf16.msra.mxu0 %v1253
  %1281 = vmatpush.bf16.msra.mxu0 %v1252
  %1282 = vmatpush.bf16.msra.mxu0 %v1251
  %1283 = vmatpush.bf16.msra.mxu0 %v1250
  %1284 = vmatpush.bf16.msra.mxu0 %v1249
  %1285 = vmatpush.bf16.msra.mxu0 %v1248
  %1286 = vmatpush.bf16.msra.mxu0 %v1247
  %1287 = vmatmul.bf16.gmra.mxu0 %v773
  %v1288 = vpop.f32.mrf.mxu0
  %v1289 = vadd.f32 %v1181, %v1288
  %v1290 = vpop.f32.mrf.mxu0
  %v1291 = vadd.f32 %v1181, %v1290
  %1292 = vmatmul.bf16.gmra.mxu0 %v775
  %v1293 = vpop.f32.mrf.mxu0
  %v1294 = vadd.f32 %v1181, %v1293
  %v1295 = vpop.f32.mrf.mxu0
  %v1296 = vadd.f32 %v1181, %v1295
  %1297 = vmatmul.bf16.gmra.mxu0 %v777
  %v1298 = vpop.f32.mrf.mxu0
  %v1299 = vadd.f32 %v1181, %v1298
  %v1300 = vpop.f32.mrf.mxu0
  %v1301 = vadd.f32 %v1181, %v1300
  %1302 = vmatmul.bf16.gmra.mxu0 %v779
  %v1303 = vpop.f32.mrf.mxu0
  %v1304 = vadd.f32 %v1181, %v1303
  %v1305 = vpop.f32.mrf.mxu0
  %v1306 = vadd.f32 %v1181, %v1305
  %1307 = vmatmul.bf16.gmra.mxu0 %v781
  %v1308 = vpop.f32.mrf.mxu0
  %v1309 = vadd.f32 %v1181, %v1308
  %v1310 = vpop.f32.mrf.mxu0
  %v1311 = vadd.f32 %v1181, %v1310
  %1312 = vmatmul.bf16.gmra.mxu0 %v783
  %v1313 = vpop.f32.mrf.mxu0
  %v1314 = vadd.f32 %v1181, %v1313
  %v1315 = vpop.f32.mrf.mxu0
  %v1316 = vadd.f32 %v1181, %v1315
  %1317 = vmatmul.bf16.gmra.mxu0 %v785
  %v1318 = vpop.f32.mrf.mxu0
  %v1319 = vadd.f32 %v1181, %v1318
  %v1320 = vpop.f32.mrf.mxu0
  %v1321 = vadd.f32 %v1181, %v1320
  %1322 = vmatmul.bf16.gmra.mxu0 %v787
  %v1323 = vpop.f32.mrf.mxu0
  %v1324 = vadd.f32 %v1181, %v1323
  %v1325 = vpop.f32.mrf.mxu0
  %v1326 = vadd.f32 %v1181, %v1325
  %1327 = vmatmul.bf16.gmra.mxu0 %v789
  %v1328 = vpop.f32.mrf.mxu0
  %v1329 = vadd.f32 %v1181, %v1328
  %v1330 = vpop.f32.mrf.mxu0
  %v1331 = vadd.f32 %v1181, %v1330
  %1332 = vmatmul.bf16.gmra.mxu0 %v791
  %v1333 = vpop.f32.mrf.mxu0
  %v1334 = vadd.f32 %v1181, %v1333
  %v1335 = vpop.f32.mrf.mxu0
  %v1336 = vadd.f32 %v1181, %v1335
  %1337 = vmatmul.bf16.gmra.mxu0 %v793
  %v1338 = vpop.f32.mrf.mxu0
  %v1339 = vadd.f32 %v1181, %v1338
  %v1340 = vpop.f32.mrf.mxu0
  %v1341 = vadd.f32 %v1181, %v1340
  %1342 = vmatmul.bf16.gmra.mxu0 %v795
  %v1343 = vpop.f32.mrf.mxu0
  %v1344 = vadd.f32 %v1181, %v1343
  %v1345 = vpop.f32.mrf.mxu0
  %v1346 = vadd.f32 %v1181, %v1345
  %1347 = vmatmul.bf16.gmra.mxu0 %v797
  %v1348 = vpop.f32.mrf.mxu0
  %v1349 = vadd.f32 %v1181, %v1348
  %v1350 = vpop.f32.mrf.mxu0
  %v1351 = vadd.f32 %v1181, %v1350
  %1352 = vmatmul.bf16.gmra.mxu0 %v799
  %v1353 = vpop.f32.mrf.mxu0
  %v1354 = vadd.f32 %v1181, %v1353
  %v1355 = vpop.f32.mrf.mxu0
  %v1356 = vadd.f32 %v1181, %v1355
  %1357 = vmatmul.bf16.gmra.mxu0 %v801
  %v1358 = vpop.f32.mrf.mxu0
  %v1359 = vadd.f32 %v1181, %v1358
  %v1360 = vpop.f32.mrf.mxu0
  %v1361 = vadd.f32 %v1181, %v1360
  %1362 = vmatmul.bf16.gmra.mxu0 %v803
  %v1363 = vpop.f32.mrf.mxu0
  %v1364 = vadd.f32 %v1181, %v1363
  %v1365 = vpop.f32.mrf.mxu0
  %v1366 = vadd.f32 %v1181, %v1365
  %1367 = vdwg.mxu0
  %1368 = vmatpush.bf16.msra.mxu0 %v1262
  %1369 = vmatpush.bf16.msra.mxu0 %v1261
  %1370 = vmatpush.bf16.msra.mxu0 %v1260
  %1371 = vmatpush.bf16.msra.mxu0 %v1259
  %1372 = vmatpush.bf16.msra.mxu0 %v1258
  %1373 = vmatpush.bf16.msra.mxu0 %v1257
  %1374 = vmatpush.bf16.msra.mxu0 %v1256
  %1375 = vmatpush.bf16.msra.mxu0 %v1255
  %1376 = vmatmul.bf16.gmra.mxu0 %v774
  %v1377 = vpop.f32.mrf.mxu0
  %v1378 = vadd.f32 %v1289, %v1377
  %v1379 = vpop.f32.mrf.mxu0
  %v1380 = vadd.f32 %v1291, %v1379
  %1381 = vmatmul.bf16.gmra.mxu0 %v776
  %v1382 = vpop.f32.mrf.mxu0
  %v1383 = vadd.f32 %v1294, %v1382
  %v1384 = vpop.f32.mrf.mxu0
  %v1385 = vadd.f32 %v1296, %v1384
  %1386 = vmatmul.bf16.gmra.mxu0 %v778
  %v1387 = vpop.f32.mrf.mxu0
  %v1388 = vadd.f32 %v1299, %v1387
  %v1389 = vpop.f32.mrf.mxu0
  %v1390 = vadd.f32 %v1301, %v1389
  %1391 = vmatmul.bf16.gmra.mxu0 %v780
  %v1392 = vpop.f32.mrf.mxu0
  %v1393 = vadd.f32 %v1304, %v1392
  %v1394 = vpop.f32.mrf.mxu0
  %v1395 = vadd.f32 %v1306, %v1394
  %1396 = vmatmul.bf16.gmra.mxu0 %v782
  %v1397 = vpop.f32.mrf.mxu0
  %v1398 = vadd.f32 %v1309, %v1397
  %v1399 = vpop.f32.mrf.mxu0
  %v1400 = vadd.f32 %v1311, %v1399
  %1401 = vmatmul.bf16.gmra.mxu0 %v784
  %v1402 = vpop.f32.mrf.mxu0
  %v1403 = vadd.f32 %v1314, %v1402
  %v1404 = vpop.f32.mrf.mxu0
  %v1405 = vadd.f32 %v1316, %v1404
  %1406 = vmatmul.bf16.gmra.mxu0 %v786
  %v1407 = vpop.f32.mrf.mxu0
  %v1408 = vadd.f32 %v1319, %v1407
  %v1409 = vpop.f32.mrf.mxu0
  %v1410 = vadd.f32 %v1321, %v1409
  %1411 = vmatmul.bf16.gmra.mxu0 %v788
  %v1412 = vpop.f32.mrf.mxu0
  %v1413 = vadd.f32 %v1324, %v1412
  %v1414 = vpop.f32.mrf.mxu0
  %v1415 = vadd.f32 %v1326, %v1414
  %1416 = vmatmul.bf16.gmra.mxu0 %v790
  %v1417 = vpop.f32.mrf.mxu0
  %v1418 = vadd.f32 %v1329, %v1417
  %v1419 = vpop.f32.mrf.mxu0
  %v1420 = vadd.f32 %v1331, %v1419
  %1421 = vmatmul.bf16.gmra.mxu0 %v792
  %v1422 = vpop.f32.mrf.mxu0
  %v1423 = vadd.f32 %v1334, %v1422
  %v1424 = vpop.f32.mrf.mxu0
  %v1425 = vadd.f32 %v1336, %v1424
  %1426 = vmatmul.bf16.gmra.mxu0 %v794
  %v1427 = vpop.f32.mrf.mxu0
  %v1428 = vadd.f32 %v1339, %v1427
  %v1429 = vpop.f32.mrf.mxu0
  %v1430 = vadd.f32 %v1341, %v1429
  %1431 = vmatmul.bf16.gmra.mxu0 %v796
  %v1432 = vpop.f32.mrf.mxu0
  %v1433 = vadd.f32 %v1344, %v1432
  %v1434 = vpop.f32.mrf.mxu0
  %v1435 = vadd.f32 %v1346, %v1434
  %1436 = vmatmul.bf16.gmra.mxu0 %v798
  %v1437 = vpop.f32.mrf.mxu0
  %v1438 = vadd.f32 %v1349, %v1437
  %v1439 = vpop.f32.mrf.mxu0
  %v1440 = vadd.f32 %v1351, %v1439
  %1441 = vmatmul.bf16.gmra.mxu0 %v800
  %v1442 = vpop.f32.mrf.mxu0
  %v1443 = vadd.f32 %v1354, %v1442
  %v1444 = vpop.f32.mrf.mxu0
  %v1445 = vadd.f32 %v1356, %v1444
  %1446 = vmatmul.bf16.gmra.mxu0 %v802
  %v1447 = vpop.f32.mrf.mxu0
  %v1448 = vadd.f32 %v1359, %v1447
  %v1449 = vpop.f32.mrf.mxu0
  %v1450 = vadd.f32 %v1361, %v1449
  %1451 = vmatmul.bf16.gmra.mxu0 %v804
  %v1452 = vpop.f32.mrf.mxu0
  %v1453 = vadd.f32 %v1364, %v1452
  %v1454 = vpop.f32.mrf.mxu0
  %v1455 = vadd.f32 %v1366, %v1454
  %1456 = vdwg.mxu0
  %v1457 = vadd.f32 %v1378, %v74
  %v1458 = vadd.f32 %v1380, %v75
  %v1459 = vadd.f32 %v1383, %v76
  %v1460 = vadd.f32 %v1385, %v77
  %v1461 = vadd.f32 %v1388, %v78
  %v1462 = vadd.f32 %v1390, %v79
  %v1463 = vadd.f32 %v1393, %v80
  %v1464 = vadd.f32 %v1395, %v81
  %v1465 = vadd.f32 %v1398, %v82
  %v1466 = vadd.f32 %v1400, %v83
  %v1467 = vadd.f32 %v1403, %v84
  %v1468 = vadd.f32 %v1405, %v85
  %v1469 = vadd.f32 %v1408, %v86
  %v1470 = vadd.f32 %v1410, %v87
  %v1471 = vadd.f32 %v1413, %v88
  %v1472 = vadd.f32 %v1415, %v89
  %v1473 = vadd.f32 %v1418, %v90
  %v1474 = vadd.f32 %v1420, %v91
  %v1475 = vadd.f32 %v1423, %v92
  %v1476 = vadd.f32 %v1425, %v93
  %v1477 = vadd.f32 %v1428, %v94
  %v1478 = vadd.f32 %v1430, %v95
  %v1479 = vadd.f32 %v1433, %v96
  %v1480 = vadd.f32 %v1435, %v97
  %v1481 = vadd.f32 %v1438, %v98
  %v1482 = vadd.f32 %v1440, %v99
  %v1483 = vadd.f32 %v1443, %v100
  %v1484 = vadd.f32 %v1445, %v101
  %v1485 = vadd.f32 %v1448, %v102
  %v1486 = vadd.f32 %v1450, %v103
  %v1487 = vadd.f32 %v1453, %v104
  %v1488 = vadd.f32 %v1455, %v105
  %v1489 = vmax.f32 %v1115, 0.0
  %v1490 = vmax.f32 %v1116, 0.0
  %v1491 = vmax.f32 %v1117, 0.0
  %v1492 = vmax.f32 %v1118, 0.0
  %v1493 = vmax.f32 %v1119, 0.0
  %v1494 = vmax.f32 %v1120, 0.0
  %v1495 = vmax.f32 %v1121, 0.0
  %v1496 = vmax.f32 %v1122, 0.0
  %v1497 = vmax.f32 %v1123, 0.0
  %v1498 = vmax.f32 %v1124, 0.0
  %v1499 = vmax.f32 %v1125, 0.0
  %v1500 = vmax.f32 %v1126, 0.0
  %v1501 = vmax.f32 %v1127, 0.0
  %v1502 = vmax.f32 %v1128, 0.0
  %v1503 = vmax.f32 %v1129, 0.0
  %v1504 = vmax.f32 %v1130, 0.0
  %v1505 = vmax.f32 %v1131, 0.0
  %v1506 = vmax.f32 %v1132, 0.0
  %v1507 = vmax.f32 %v1133, 0.0
  %v1508 = vmax.f32 %v1134, 0.0
  %v1509 = vmax.f32 %v1135, 0.0
  %v1510 = vmax.f32 %v1136, 0.0
  %v1511 = vmax.f32 %v1137, 0.0
  %v1512 = vmax.f32 %v1138, 0.0
  %v1513 = vmax.f32 %v1139, 0.0
  %v1514 = vmax.f32 %v1140, 0.0
  %v1515 = vmax.f32 %v1141, 0.0
  %v1516 = vmax.f32 %v1142, 0.0
  %v1517 = vmax.f32 %v1143, 0.0
  %v1518 = vmax.f32 %v1144, 0.0
  %v1519 = vmax.f32 %v1145, 0.0
  %v1520 = vmax.f32 %v1146, 0.0
  %v1521 = vmax.f32 %v1457, 0.0
  %v1522 = vmax.f32 %v1458, 0.0
  %v1523 = vmax.f32 %v1459, 0.0
  %v1524 = vmax.f32 %v1460, 0.0
  %v1525 = vmax.f32 %v1461, 0.0
  %v1526 = vmax.f32 %v1462, 0.0
  %v1527 = vmax.f32 %v1463, 0.0
  %v1528 = vmax.f32 %v1464, 0.0
  %v1529 = vmax.f32 %v1465, 0.0
  %v1530 = vmax.f32 %v1466, 0.0
  %v1531 = vmax.f32 %v1467, 0.0
  %v1532 = vmax.f32 %v1468, 0.0
  %v1533 = vmax.f32 %v1469, 0.0
  %v1534 = vmax.f32 %v1470, 0.0
  %v1535 = vmax.f32 %v1471, 0.0
  %v1536 = vmax.f32 %v1472, 0.0
  %v1537 = vmax.f32 %v1473, 0.0
  %v1538 = vmax.f32 %v1474, 0.0
  %v1539 = vmax.f32 %v1475, 0.0
  %v1540 = vmax.f32 %v1476, 0.0
  %v1541 = vmax.f32 %v1477, 0.0
  %v1542 = vmax.f32 %v1478, 0.0
  %v1543 = vmax.f32 %v1479, 0.0
  %v1544 = vmax.f32 %v1480, 0.0
  %v1545 = vmax.f32 %v1481, 0.0
  %v1546 = vmax.f32 %v1482, 0.0
  %v1547 = vmax.f32 %v1483, 0.0
  %v1548 = vmax.f32 %v1484, 0.0
  %v1549 = vmax.f32 %v1485, 0.0
  %v1550 = vmax.f32 %v1486, 0.0
  %v1551 = vmax.f32 %v1487, 0.0
  %v1552 = vmax.f32 %v1488, 0.0
  %v1553 = vpack.c.bf16 %v1490, %v1489
  %v1554 = vpack.c.bf16 %v1492, %v1491
  %v1555 = vpack.c.bf16 %v1494, %v1493
  %v1556 = vpack.c.bf16 %v1496, %v1495
  %v1557 = vpack.c.bf16 %v1498, %v1497
  %v1558 = vpack.c.bf16 %v1500, %v1499
  %v1559 = vpack.c.bf16 %v1502, %v1501
  %v1560 = vpack.c.bf16 %v1504, %v1503
  %v1561 = vpack.c.bf16 %v1506, %v1505
  %v1562 = vpack.c.bf16 %v1508, %v1507
  %v1563 = vpack.c.bf16 %v1510, %v1509
  %v1564 = vpack.c.bf16 %v1512, %v1511
  %v1565 = vpack.c.bf16 %v1514, %v1513
  %v1566 = vpack.c.bf16 %v1516, %v1515
  %v1567 = vpack.c.bf16 %v1518, %v1517
  %v1568 = vpack.c.bf16 %v1520, %v1519
  %v1569 = vld [vmem:[%s9] sm:$0xf]
  %v1570 = vld [vmem:[%s9 + $0x4] sm:$0xf]
  %v1571 = vld [vmem:[%s9 + $0x8] sm:$0xf]
  %v1572 = vld [vmem:[%s9 + $0xc] sm:$0xf]
  %v1573 = vpack.c.bf16 %v1522, %v1521
  %v1574 = vpack.c.bf16 %v1524, %v1523
  %v1575 = vpack.c.bf16 %v1526, %v1525
  %v1576 = vpack.c.bf16 %v1528, %v1527
  %v1577 = vpack.c.bf16 %v1530, %v1529
  %v1578 = vpack.c.bf16 %v1532, %v1531
  %v1579 = vpack.c.bf16 %v1534, %v1533
  %v1580 = vpack.c.bf16 %v1536, %v1535
  %v1581 = vpack.c.bf16 %v1538, %v1537
  %v1582 = vpack.c.bf16 %v1540, %v1539
  %v1583 = vpack.c.bf16 %v1542, %v1541
  %v1584 = vpack.c.bf16 %v1544, %v1543
  %v1585 = vpack.c.bf16 %v1546, %v1545
  %v1586 = vpack.c.bf16 %v1548, %v1547
  %v1587 = vpack.c.bf16 %v1550, %v1549
  %v1588 = vpack.c.bf16 %v1552, %v1551
  %v1589 = vld [vmem:[%s10] sm:$0xf]
  %v1590 = vld [vmem:[%s10 + $0x4] sm:$0xf]
  %v1591 = vld [vmem:[%s10 + $0x8] sm:$0xf]
  %v1592 = vld [vmem:[%s10 + $0xc] sm:$0xf]
  %v1597 = vunpack.c.l.b16 %v1589
  %v1598 = vunpack.c.l.b16 %v1590
  %v1599 = vunpack.c.l.b16 %v1591
  %v1600 = vunpack.c.l.b16 %v1592
  %v1601 = vpack.c.b16 %v1598, %v1597
  %v1602 = vpack.c.b16 %v1600, %v1599
  %v1606 = vsel %vm166, %v1573, 0
  %v1609 = vsel %vm166, %v1574, 0
  %v1612 = vsel %vm166, %v1575, 0
  %v1615 = vsel %vm166, %v1576, 0
  %v1618 = vsel %vm166, %v1577, 0
  %v1621 = vsel %vm166, %v1578, 0
  %v1624 = vsel %vm166, %v1579, 0
  %v1627 = vsel %vm166, %v1580, 0
  %v1630 = vsel %vm166, %v1581, 0
  %v1633 = vsel %vm166, %v1582, 0
  %v1636 = vsel %vm166, %v1583, 0
  %v1639 = vsel %vm166, %v1584, 0
  %v1642 = vsel %vm166, %v1585, 0
  %v1645 = vsel %vm166, %v1586, 0
  %v1648 = vsel %vm166, %v1587, 0
  %v1651 = vsel %vm166, %v1588, 0
  %1653 = vmatpush.bf16.msra.mxu0 0
  %1654 = vmatpush.bf16.msra.mxu0 0
  %1655 = vmatpush.bf16.msra.mxu0 0
  %1656 = vmatpush.bf16.msra.mxu0 0
  %1657 = vmatpush.bf16.msra.mxu0 0
  %1658 = vmatpush.bf16.msra.mxu0 0
  %1659 = vmatpush.bf16.msra.mxu0 %v1602
  %1660 = vmatpush.bf16.msra.mxu0 %v1601
  %1661 = vmatmul.bf16.gmra.mxu0 %v1606
  %v1662 = vpop.f32.mrf.mxu0
  %v1663 = vadd.f32 0.0, %v1662
  %v1664 = vpop.f32.mrf.mxu0
  %v1665 = vadd.f32 0.0, %v1664
  %1666 = vmatmul.bf16.gmra.mxu0 %v1609
  %v1667 = vpop.f32.mrf.mxu0
  %v1668 = vadd.f32 0.0, %v1667
  %v1669 = vpop.f32.mrf.mxu0
  %v1670 = vadd.f32 0.0, %v1669
  %1671 = vmatmul.bf16.gmra.mxu0 %v1612
  %v1672 = vpop.f32.mrf.mxu0
  %v1673 = vadd.f32 0.0, %v1672
  %v1674 = vpop.f32.mrf.mxu0
  %v1675 = vadd.f32 0.0, %v1674
  %1676 = vmatmul.bf16.gmra.mxu0 %v1615
  %v1677 = vpop.f32.mrf.mxu0
  %v1678 = vadd.f32 0.0, %v1677
  %v1679 = vpop.f32.mrf.mxu0
  %v1680 = vadd.f32 0.0, %v1679
  %1681 = vmatmul.bf16.gmra.mxu0 %v1618
  %v1682 = vpop.f32.mrf.mxu0
  %v1683 = vadd.f32 0.0, %v1682
  %v1684 = vpop.f32.mrf.mxu0
  %v1685 = vadd.f32 0.0, %v1684
  %1686 = vmatmul.bf16.gmra.mxu0 %v1621
  %v1687 = vpop.f32.mrf.mxu0
  %v1688 = vadd.f32 0.0, %v1687
  %v1689 = vpop.f32.mrf.mxu0
  %v1690 = vadd.f32 0.0, %v1689
  %1691 = vmatmul.bf16.gmra.mxu0 %v1624
  %v1692 = vpop.f32.mrf.mxu0
  %v1693 = vadd.f32 0.0, %v1692
  %v1694 = vpop.f32.mrf.mxu0
  %v1695 = vadd.f32 0.0, %v1694
  %1696 = vmatmul.bf16.gmra.mxu0 %v1627
  %v1697 = vpop.f32.mrf.mxu0
  %v1698 = vadd.f32 0.0, %v1697
  %v1699 = vpop.f32.mrf.mxu0
  %v1700 = vadd.f32 0.0, %v1699
  %1701 = vmatmul.bf16.gmra.mxu0 %v1630
  %v1702 = vpop.f32.mrf.mxu0
  %v1703 = vadd.f32 0.0, %v1702
  %v1704 = vpop.f32.mrf.mxu0
  %v1705 = vadd.f32 0.0, %v1704
  %1706 = vmatmul.bf16.gmra.mxu0 %v1633
  %v1707 = vpop.f32.mrf.mxu0
  %v1708 = vadd.f32 0.0, %v1707
  %v1709 = vpop.f32.mrf.mxu0
  %v1710 = vadd.f32 0.0, %v1709
  %1711 = vmatmul.bf16.gmra.mxu0 %v1636
  %v1712 = vpop.f32.mrf.mxu0
  %v1713 = vadd.f32 0.0, %v1712
  %v1714 = vpop.f32.mrf.mxu0
  %v1715 = vadd.f32 0.0, %v1714
  %1716 = vmatmul.bf16.gmra.mxu0 %v1639
  %v1717 = vpop.f32.mrf.mxu0
  %v1718 = vadd.f32 0.0, %v1717
  %v1719 = vpop.f32.mrf.mxu0
  %v1720 = vadd.f32 0.0, %v1719
  %1721 = vmatmul.bf16.gmra.mxu0 %v1642
  %v1722 = vpop.f32.mrf.mxu0
  %v1723 = vadd.f32 0.0, %v1722
  %v1724 = vpop.f32.mrf.mxu0
  %v1725 = vadd.f32 0.0, %v1724
  %1726 = vmatmul.bf16.gmra.mxu0 %v1645
  %v1727 = vpop.f32.mrf.mxu0
  %v1728 = vadd.f32 0.0, %v1727
  %v1729 = vpop.f32.mrf.mxu0
  %v1730 = vadd.f32 0.0, %v1729
  %1731 = vmatmul.bf16.gmra.mxu0 %v1648
  %v1732 = vpop.f32.mrf.mxu0
  %v1733 = vadd.f32 0.0, %v1732
  %v1734 = vpop.f32.mrf.mxu0
  %v1735 = vadd.f32 0.0, %v1734
  %1736 = vmatmul.bf16.gmra.mxu0 %v1651
  %v1737 = vpop.f32.mrf.mxu0
  %v1738 = vadd.f32 0.0, %v1737
  %v1739 = vpop.f32.mrf.mxu0
  %v1740 = vadd.f32 0.0, %v1739
  %1741 = vdwg.mxu0
  %v1746 = vunpack.c.l.b16 %v1569
  %v1747 = vunpack.c.l.b16 %v1570
  %v1748 = vunpack.c.l.b16 %v1571
  %v1749 = vunpack.c.l.b16 %v1572
  %v1750 = vpack.c.b16 %v1747, %v1746
  %v1751 = vpack.c.b16 %v1749, %v1748
  %v1755 = vsel %vm166, %v1553, 0
  %v1758 = vsel %vm166, %v1554, 0
  %v1761 = vsel %vm166, %v1555, 0
  %v1764 = vsel %vm166, %v1556, 0
  %v1767 = vsel %vm166, %v1557, 0
  %v1770 = vsel %vm166, %v1558, 0
  %v1773 = vsel %vm166, %v1559, 0
  %v1776 = vsel %vm166, %v1560, 0
  %v1779 = vsel %vm166, %v1561, 0
  %v1782 = vsel %vm166, %v1562, 0
  %v1785 = vsel %vm166, %v1563, 0
  %v1788 = vsel %vm166, %v1564, 0
  %v1791 = vsel %vm166, %v1565, 0
  %v1794 = vsel %vm166, %v1566, 0
  %v1797 = vsel %vm166, %v1567, 0
  %v1800 = vsel %vm166, %v1568, 0
  %1802 = vmatpush.bf16.msra.mxu0 0
  %1803 = vmatpush.bf16.msra.mxu0 0
  %1804 = vmatpush.bf16.msra.mxu0 0
  %1805 = vmatpush.bf16.msra.mxu0 0
  %1806 = vmatpush.bf16.msra.mxu0 0
  %1807 = vmatpush.bf16.msra.mxu0 0
  %1808 = vmatpush.bf16.msra.mxu0 %v1751
  %1809 = vmatpush.bf16.msra.mxu0 %v1750
  %1810 = vmatmul.bf16.gmra.mxu0 %v1755
  %v1811 = vpop.f32.mrf.mxu0
  %v1812 = vadd.f32 %v1663, %v1811
  %v1813 = vpop.f32.mrf.mxu0
  %v1814 = vadd.f32 %v1665, %v1813
  %1815 = vmatmul.bf16.gmra.mxu0 %v1758
  %v1816 = vpop.f32.mrf.mxu0
  %v1817 = vadd.f32 %v1668, %v1816
  %v1818 = vpop.f32.mrf.mxu0
  %v1819 = vadd.f32 %v1670, %v1818
  %1820 = vmatmul.bf16.gmra.mxu0 %v1761
  %v1821 = vpop.f32.mrf.mxu0
  %v1822 = vadd.f32 %v1673, %v1821
  %v1823 = vpop.f32.mrf.mxu0
  %v1824 = vadd.f32 %v1675, %v1823
  %1825 = vmatmul.bf16.gmra.mxu0 %v1764
  %v1826 = vpop.f32.mrf.mxu0
  %v1827 = vadd.f32 %v1678, %v1826
  %v1828 = vpop.f32.mrf.mxu0
  %v1829 = vadd.f32 %v1680, %v1828
  %1830 = vmatmul.bf16.gmra.mxu0 %v1767
  %v1831 = vpop.f32.mrf.mxu0
  %v1832 = vadd.f32 %v1683, %v1831
  %v1833 = vpop.f32.mrf.mxu0
  %v1834 = vadd.f32 %v1685, %v1833
  %1835 = vmatmul.bf16.gmra.mxu0 %v1770
  %v1836 = vpop.f32.mrf.mxu0
  %v1837 = vadd.f32 %v1688, %v1836
  %v1838 = vpop.f32.mrf.mxu0
  %v1839 = vadd.f32 %v1690, %v1838
  %1840 = vmatmul.bf16.gmra.mxu0 %v1773
  %v1841 = vpop.f32.mrf.mxu0
  %v1842 = vadd.f32 %v1693, %v1841
  %v1843 = vpop.f32.mrf.mxu0
  %v1844 = vadd.f32 %v1695, %v1843
  %1845 = vmatmul.bf16.gmra.mxu0 %v1776
  %v1846 = vpop.f32.mrf.mxu0
  %v1847 = vadd.f32 %v1698, %v1846
  %v1848 = vpop.f32.mrf.mxu0
  %v1849 = vadd.f32 %v1700, %v1848
  %1850 = vmatmul.bf16.gmra.mxu0 %v1779
  %v1851 = vpop.f32.mrf.mxu0
  %v1852 = vadd.f32 %v1703, %v1851
  %v1853 = vpop.f32.mrf.mxu0
  %v1854 = vadd.f32 %v1705, %v1853
  %1855 = vmatmul.bf16.gmra.mxu0 %v1782
  %v1856 = vpop.f32.mrf.mxu0
  %v1857 = vadd.f32 %v1708, %v1856
  %v1858 = vpop.f32.mrf.mxu0
  %v1859 = vadd.f32 %v1710, %v1858
  %1860 = vmatmul.bf16.gmra.mxu0 %v1785
  %v1861 = vpop.f32.mrf.mxu0
  %v1862 = vadd.f32 %v1713, %v1861
  %v1863 = vpop.f32.mrf.mxu0
  %v1864 = vadd.f32 %v1715, %v1863
  %1865 = vmatmul.bf16.gmra.mxu0 %v1788
  %v1866 = vpop.f32.mrf.mxu0
  %v1867 = vadd.f32 %v1718, %v1866
  %v1868 = vpop.f32.mrf.mxu0
  %v1869 = vadd.f32 %v1720, %v1868
  %1870 = vmatmul.bf16.gmra.mxu0 %v1791
  %v1871 = vpop.f32.mrf.mxu0
  %v1872 = vadd.f32 %v1723, %v1871
  %v1873 = vpop.f32.mrf.mxu0
  %v1874 = vadd.f32 %v1725, %v1873
  %1875 = vmatmul.bf16.gmra.mxu0 %v1794
  %v1876 = vpop.f32.mrf.mxu0
  %v1877 = vadd.f32 %v1728, %v1876
  %v1878 = vpop.f32.mrf.mxu0
  %v1879 = vadd.f32 %v1730, %v1878
  %1880 = vmatmul.bf16.gmra.mxu0 %v1797
  %v1881 = vpop.f32.mrf.mxu0
  %v1882 = vadd.f32 %v1733, %v1881
  %v1883 = vpop.f32.mrf.mxu0
  %v1884 = vadd.f32 %v1735, %v1883
  %1885 = vmatmul.bf16.gmra.mxu0 %v1800
  %v1886 = vpop.f32.mrf.mxu0
  %v1887 = vadd.f32 %v1738, %v1886
  %v1888 = vpop.f32.mrf.mxu0
  %v1889 = vadd.f32 %v1740, %v1888
  %1890 = vdwg.mxu0
  %v1891 = vld [vmem:[%s11] sm:$0x1]
  %v1893 = vperm.slane %v1891, 0
  %v1895 = vadd.f32 %v1812, %v1893
  %v1896 = vadd.f32 %v1814, %v1893
  %v1897 = vadd.f32 %v1817, %v1893
  %v1898 = vadd.f32 %v1819, %v1893
  %v1899 = vadd.f32 %v1822, %v1893
  %v1900 = vadd.f32 %v1824, %v1893
  %v1901 = vadd.f32 %v1827, %v1893
  %v1902 = vadd.f32 %v1829, %v1893
  %v1903 = vadd.f32 %v1832, %v1893
  %v1904 = vadd.f32 %v1834, %v1893
  %v1905 = vadd.f32 %v1837, %v1893
  %v1906 = vadd.f32 %v1839, %v1893
  %v1907 = vadd.f32 %v1842, %v1893
  %v1908 = vadd.f32 %v1844, %v1893
  %v1909 = vadd.f32 %v1847, %v1893
  %v1910 = vadd.f32 %v1849, %v1893
  %v1911 = vadd.f32 %v1852, %v1893
  %v1912 = vadd.f32 %v1854, %v1893
  %v1913 = vadd.f32 %v1857, %v1893
  %v1914 = vadd.f32 %v1859, %v1893
  %v1915 = vadd.f32 %v1862, %v1893
  %v1916 = vadd.f32 %v1864, %v1893
  %v1917 = vadd.f32 %v1867, %v1893
  %v1918 = vadd.f32 %v1869, %v1893
  %v1919 = vadd.f32 %v1872, %v1893
  %v1920 = vadd.f32 %v1874, %v1893
  %v1921 = vadd.f32 %v1877, %v1893
  %v1922 = vadd.f32 %v1879, %v1893
  %v1923 = vadd.f32 %v1882, %v1893
  %v1924 = vadd.f32 %v1884, %v1893
  %v1925 = vadd.f32 %v1887, %v1893
  %v1926 = vadd.f32 %v1889, %v1893
  %1927 = vst.msk [vmem:[%s12] sm:$0xff] %vm166, %v1895
  %1928 = vst.msk [vmem:[%s12 + $0x8] sm:$0xff] %vm166, %v1896
  %1929 = vst.msk [vmem:[%s12 + $0x10] sm:$0xff] %vm166, %v1897
  %1930 = vst.msk [vmem:[%s12 + $0x18] sm:$0xff] %vm166, %v1898
  %1931 = vst.msk [vmem:[%s12 + $0x20] sm:$0xff] %vm166, %v1899
  %1932 = vst.msk [vmem:[%s12 + $0x28] sm:$0xff] %vm166, %v1900
  %1933 = vst.msk [vmem:[%s12 + $0x30] sm:$0xff] %vm166, %v1901
  %1934 = vst.msk [vmem:[%s12 + $0x38] sm:$0xff] %vm166, %v1902
  %1935 = vst.msk [vmem:[%s12 + $0x40] sm:$0xff] %vm166, %v1903
  %1936 = vst.msk [vmem:[%s12 + $0x48] sm:$0xff] %vm166, %v1904
  %1937 = vst.msk [vmem:[%s12 + $0x50] sm:$0xff] %vm166, %v1905
  %1938 = vst.msk [vmem:[%s12 + $0x58] sm:$0xff] %vm166, %v1906
  %1939 = vst.msk [vmem:[%s12 + $0x60] sm:$0xff] %vm166, %v1907
  %1940 = vst.msk [vmem:[%s12 + $0x68] sm:$0xff] %vm166, %v1908
  %1941 = vst.msk [vmem:[%s12 + $0x70] sm:$0xff] %vm166, %v1909
  %1942 = vst.msk [vmem:[%s12 + $0x78] sm:$0xff] %vm166, %v1910
  %1943 = vst.msk [vmem:[%s12 + $0x80] sm:$0xff] %vm166, %v1911
  %1944 = vst.msk [vmem:[%s12 + $0x88] sm:$0xff] %vm166, %v1912
  %1945 = vst.msk [vmem:[%s12 + $0x90] sm:$0xff] %vm166, %v1913
  %1946 = vst.msk [vmem:[%s12 + $0x98] sm:$0xff] %vm166, %v1914
  %1947 = vst.msk [vmem:[%s12 + $0xa0] sm:$0xff] %vm166, %v1915
  %1948 = vst.msk [vmem:[%s12 + $0xa8] sm:$0xff] %vm166, %v1916
  %1949 = vst.msk [vmem:[%s12 + $0xb0] sm:$0xff] %vm166, %v1917
  %1950 = vst.msk [vmem:[%s12 + $0xb8] sm:$0xff] %vm166, %v1918
  %1951 = vst.msk [vmem:[%s12 + $0xc0] sm:$0xff] %vm166, %v1919
  %1952 = vst.msk [vmem:[%s12 + $0xc8] sm:$0xff] %vm166, %v1920
  %1953 = vst.msk [vmem:[%s12 + $0xd0] sm:$0xff] %vm166, %v1921
  %1954 = vst.msk [vmem:[%s12 + $0xd8] sm:$0xff] %vm166, %v1922
  %1955 = vst.msk [vmem:[%s12 + $0xe0] sm:$0xff] %vm166, %v1923
  %1956 = vst.msk [vmem:[%s12 + $0xe8] sm:$0xff] %vm166, %v1924
  %1957 = vst.msk [vmem:[%s12 + $0xf0] sm:$0xff] %vm166, %v1925
  %1958 = vst.msk [vmem:[%s12 + $0xf8] sm:$0xff] %vm166, %v1926
  // Predicated region
  $region50: #{tpu_custom_call.1} parent=0 // pred_check
    _
  $region51: #{tpu_custom_call.1} parent=0 // pred_check_branch
    %1960 = sbr.rel (0) target = $region53
  $region52: #{tpu_custom_call.1} parent=0 // pred_region
    _
  $region53: #{tpu_custom_call.1} parent=0 // pred_fallthru
    _
  // Predicated region
  $region54: #{tpu_custom_call.1} parent=0 // pred_check
    _
  $region55: #{tpu_custom_call.1} parent=0 // pred_check_branch
    %1962 = sbr.rel (0) target = $region57
  $region56: #{tpu_custom_call.1} parent=0 // pred_region
    _
  $region57: #{tpu_custom_call.1} parent=0 // pred_fallthru
    _

</llo_original>
